<compile_context>
chip_gen: v6e
topology: v6e:2x2x1
jax: 0.10.0
libtpu: 0.0.40
codegen_flags: <defaults>
</compile_context>

<pallas_src>
import functools

import jax
import jax.numpy as jnp
from jax.experimental import pallas as pl
from jax.experimental.pallas import tpu as pltpu


# ---------------------------------------------------------------------------
# Kernel
# ---------------------------------------------------------------------------
def _layernorm(x, gamma, beta, eps):
    mean = jnp.mean(x, axis=-1, keepdims=True)
    var = jnp.mean((x - mean) ** 2, axis=-1, keepdims=True)  # biased var (PyTorch)
    return (x - mean) * jax.lax.rsqrt(var + eps) * gamma + beta


def stack_kernel(x_ref, bias_ref,
                 g1_ref, be1_ref, wqkv_ref, bqkv_ref, wp_ref, bp_ref,
                 g2_ref, be2_ref, w1_ref, c1_ref, w2_ref, c2_ref,
                 o_ref, *, heads, eps):
    layer = pl.program_id(1)

    # Layer 0: initialize the resident activations (carried in the output
    # block across the inner depth axis) from this batch-block's tokens.
    @pl.when(layer == 0)
    def _():
        o_ref[...] = x_ref[...]

    x = o_ref[...]                              # (R, D) f32 carry, R = Bb*N
    R, D = x.shape
    H = heads
    Dh = D // H

    # Hoist small parameter loads once per layer step.
    g1, be1 = g1_ref[...], be1_ref[...]
    g2, be2 = g2_ref[...], be2_ref[...]
    bqkv, bp, c1, c2 = bqkv_ref[...], bp_ref[...], c1_ref[...], c2_ref[...]
    attn_bias = bias_ref[...]                   # (R, R): 0 in-block, -1e9 across

    # ---- norm1 + fused QKV projection (1/sqrt(scale) folded into wq/bq) ----
    xn = _layernorm(x, g1, be1, eps)
    qkv = jnp.dot(xn.astype(jnp.bfloat16), wqkv_ref[...],
                  preferred_element_type=jnp.float32) + bqkv        # (R, 3D) f32
    qkv = qkv.astype(jnp.bfloat16)              # single cast before head split

    # ---- multi-head self attention, matmuls batched over heads -------------
    q = jnp.stack([qkv[:, h * Dh:(h + 1) * Dh] for h in range(H)], axis=0)
    k = jnp.stack([qkv[:, D + h * Dh:D + (h + 1) * Dh] for h in range(H)], axis=0)
    v = jnp.stack([qkv[:, 2 * D + h * Dh:2 * D + (h + 1) * Dh] for h in range(H)], axis=0)

    s = jnp.einsum('hnd,hmd->hnm', q, k,
                   preferred_element_type=jnp.float32)              # (H, R, R)
    s = s + attn_bias                   # block-diagonal: no cross-batch attention
    s = s - jnp.max(s, axis=-1, keepdims=True)
    p = jnp.exp(s)
    p = p * pl.reciprocal(jnp.sum(p, axis=-1, keepdims=True), approx=True)
    ctx = jnp.einsum('hnm,hmd->hnd', p.astype(jnp.bfloat16), v,
                     preferred_element_type=jnp.float32)            # (H, R, Dh)

    # Head merge -> one full-width output projection + residual.
    h_cat = jnp.concatenate([ctx[h] for h in range(H)], axis=-1)    # (R, D)
    proj = jnp.dot(h_cat.astype(jnp.bfloat16), wp_ref[...],
                   preferred_element_type=jnp.float32) + bp
    x = x + proj

    # ---- norm2 + position-wise feed forward (quick-GELU) + residual --------
    xn2 = _layernorm(x, g2, be2, eps)
    f = jnp.dot(xn2.astype(jnp.bfloat16), w1_ref[...],
                preferred_element_type=jnp.float32) + c1
    f = f * jax.nn.sigmoid(1.702 * f)                               # quick_gelu
    f = jnp.dot(f.astype(jnp.bfloat16), w2_ref[...],
                preferred_element_type=jnp.float32) + c2
    o_ref[...] = x + f


# ---------------------------------------------------------------------------
# Wrapper: fuse QKV (+ scale fold), stack layers along depth, weights in bf16
# ---------------------------------------------------------------------------
_PACKED_ORDER = ['g1', 'be1', 'wqkv', 'bqkv', 'wp', 'bp',
                 'g2', 'be2', 'w1', 'c1', 'w2', 'c2']


def pack_params(all_params, scale):
    inv = 1.0 / (float(scale) ** 0.5)           # folded into q projection
    bf16 = jnp.bfloat16

    def stack(fn, dtype=jnp.float32):
        return jnp.stack([fn(p) for p in all_params], axis=0).astype(dtype)

    return dict(
        g1=stack(lambda p: p['g1']),
        be1=stack(lambda p: p['be1']),
        wqkv=stack(lambda p: jnp.concatenate([p['wq'] * inv, p['wk'], p['wv']], axis=1), bf16),
        bqkv=stack(lambda p: jnp.concatenate([p['bq'] * inv, p['bk'], p['bv']], axis=1)),
        wp=stack(lambda p: p['wp'], bf16),
        bp=stack(lambda p: p['bp']),
        g2=stack(lambda p: p['g2']),
        be2=stack(lambda p: p['be2']),
        w1=stack(lambda p: p['w1'], bf16),
        c1=stack(lambda p: p['c1']),
        w2=stack(lambda p: p['w2'], bf16),
        c2=stack(lambda p: p['c2']),
    )


def _block_diag_bias(batch_block, n_tokens):
    """Additive attention bias: 0 within a folded batch element, -1e9 across."""
    r = batch_block * n_tokens
    ids = jnp.arange(r) // n_tokens
    same = ids[:, None] == ids[None, :]
    return jnp.where(same, 0.0, -1e9).astype(jnp.float32)


def transformer_forward(x, all_params, *, heads, scale, eps, batch_block=None):
    """Runs the whole `depth`-layer Transformer stack in a single pallas_call."""
    B, N, D = x.shape
    depth = len(all_params)

    # Fold the whole batch into one carried activation block by default
    # (v5e/v6e: 1 TensorCore).  On v7x (2 TCs) pass batch_block = B // 2 so
    # the "parallel" grid axis has >= 2 blocks and both cores stay busy.
    Bb = B if batch_block is None else batch_block
    assert B % Bb == 0, "batch must divide evenly into batch blocks"
    R = Bb * N

    packed = pack_params(all_params, scale)
    weights = [packed[name] for name in _PACKED_ORDER]   # each (depth, r, c)

    x2d = x.reshape(B * N, D)                            # host-side, free
    attn_bias = _block_diag_bias(Bb, N)                  # (R, R), resident in VMEM

    def _wspec(arr):
        # Per-layer slice of a depth-stacked parameter; block index follows the
        # inner depth axis so layer l+1 weights prefetch while layer l computes.
        return pl.BlockSpec((pl.Squeezed(),) + arr.shape[1:],
                            lambda b, l: (l, 0, 0))

    # Output block index constant across depth => activations carried in VMEM.
    act_spec = pl.BlockSpec((R, D), lambda b, l: (b, 0))
    bias_spec = pl.BlockSpec((R, R), lambda b, l: (0, 0))

    # VMEM budget: enough to double-buffer full per-layer weights plus
    # activations/scratch.  Fine on v5e/v6e (128 MiB physical).  On v7x
    # (64 MiB) real ViT-size FFN weights should instead be K-tiled with an
    # inner grid axis / pltpu.emit_pipeline and the limit capped ~48-56 MiB.
    per_layer_w_bytes = sum((int(w.size) // depth) * w.dtype.itemsize for w in weights)
    vmem_limit = int(max(32 << 20, min(100 << 20, 4 * per_layer_w_bytes + (8 << 20))))

    kernel = functools.partial(stack_kernel, heads=heads, eps=eps)
    out2d = pl.pallas_call(
        kernel,
        out_shape=jax.ShapeDtypeStruct((B * N, D), jnp.float32),
        grid_spec=pltpu.PrefetchScalarGridSpec(
            num_scalar_prefetch=0,
            # depth MUST stay innermost: the o_ref carry relies on the output
            # block index being constant across the depth axis.
            grid=(B // Bb, depth),
            in_specs=[act_spec, bias_spec] + [_wspec(w) for w in weights],
            out_specs=act_spec,
        ),
        compiler_params=pltpu.CompilerParams(
            dimension_semantics=("parallel", "arbitrary"),
            vmem_limit_bytes=vmem_limit,
        ),
    )(x2d, attn_bias, *weights)
    return out2d.reshape(B, N, D)


# ---------------------------------------------------------------------------
# Deterministic parameter init (shapes from the module's __init__)
# ---------------------------------------------------------------------------
def init_block_params(key, dim, ff_dim):
    ks = jax.random.split(key, 8)
    s = 0.02
    return {
        'g1':  jnp.ones((1, dim), jnp.float32),
        'be1': jnp.zeros((1, dim), jnp.float32),
        'wq':  s * jax.random.normal(ks[0], (dim, dim), jnp.float32),
        'bq':  jnp.zeros((1, dim), jnp.float32),
        'wk':  s * jax.random.normal(ks[1], (dim, dim), jnp.float32),
        'bk':  jnp.zeros((1, dim), jnp.float32),
        'wv':  s * jax.random.normal(ks[2], (dim, dim), jnp.float32),
        'bv':  jnp.zeros((1, dim), jnp.float32),
        'wp':  s * jax.random.normal(ks[3], (dim, dim), jnp.float32),
        'bp':  jnp.zeros((1, dim), jnp.float32),
        'g2':  jnp.ones((1, dim), jnp.float32),
        'be2': jnp.zeros((1, dim), jnp.float32),
        'w1':  s * jax.random.normal(ks[4], (dim, ff_dim), jnp.float32),
        'c1':  jnp.zeros((1, ff_dim), jnp.float32),
        'w2':  s * jax.random.normal(ks[5], (ff_dim, dim), jnp.float32),
        'c2':  jnp.zeros((1, dim), jnp.float32),
    }


# ---------------------------------------------------------------------------
# Pure-JAX f32 reference (mirrors the PyTorch forward) for a correctness check
# ---------------------------------------------------------------------------
def ref_block(x, p, *, heads, scale, eps):
    def ln(t, g, b):
        m = jnp.mean(t, -1, keepdims=True)
        v = jnp.mean((t - m) ** 2, -1, keepdims=True)
        return (t - m) / jnp.sqrt(v + eps) * g + b

    B, N, D = x.shape
    Dh = D // heads
    xn = ln(x, p['g1'], p['be1'])
    q = xn @ p['wq'] + p['bq']
    k = xn @ p['wk'] + p['bk']
    v = xn @ p['wv'] + p['bv']
    split = lambda t: t.reshape(B, N, heads, Dh).transpose(0, 2, 1, 3)
    q, k, v = split(q), split(k), split(v)
    s = jnp.einsum('bhnd,bhmd->bhnm', q, k) / jnp.sqrt(float(scale))
    s = jax.nn.softmax(s, axis=-1)
    h = jnp.einsum('bhnm,bhmd->bhnd', s, v).transpose(0, 2, 1, 3).reshape(B, N, D)
    h = h @ p['wp'] + p['bp']
    x = x + h
    xn2 = ln(x, p['g2'], p['be2'])
    f = xn2 @ p['w1'] + p['c1']
    f = f * jax.nn.sigmoid(1.702 * f)
    f = f @ p['w2'] + p['c2']
    return x + f


if __name__ == "__main__":
    # Transformer(dim=32, depth=2, heads=4, ff_dim=64, eps=1e-6,
    #             att_scale='per_head', gelu_type='quick')
    B, N, dim, depth, heads, ff_dim = 2, 8, 32, 2, 4, 64
    eps = 1e-6
    scale = dim // heads            # att_scale == 'per_head'

    key = jax.random.PRNGKey(0)
    kx, kp = jax.random.split(key)
    x = jax.random.normal(kx, (B, N, dim), jnp.float32)

    block_keys = jax.random.split(kp, depth)
    all_params = [init_block_params(k, dim, ff_dim) for k in block_keys]

    out = transformer_forward(x, all_params, heads=heads, scale=scale, eps=eps)
    out = jax.block_until_ready(out)

    # correctness check against a pure-f32 JAX reference of the PyTorch forward
    # (looser tolerance because kernel matmuls use bf16 operands / f32 accum)
    ref = x
    for p in all_params:
        ref = ref_block(ref, p, heads=heads, scale=scale, eps=eps)
    assert out.shape == (B, N, dim)
    assert jnp.allclose(out, ref, rtol=2e-2, atol=2e-2), \
        f"max abs err = {jnp.max(jnp.abs(out - ref))}"

    print("KERNEL_OK")
</pallas_src>

<mosaic_0001>
module attributes {stable_mosaic.version = 11 : i64} {
  func.func @stack_kernel(%arg0: i32, %arg1: i32, %arg2: memref<16x32xf32, #tpu.memory_space<vmem>>, %arg3: memref<16x16xf32, #tpu.memory_space<vmem>>, %arg4: memref<1x1x32xf32, #tpu.memory_space<vmem>>, %arg5: memref<1x1x32xf32, #tpu.memory_space<vmem>>, %arg6: memref<1x32x96xbf16, #tpu.memory_space<vmem>>, %arg7: memref<1x1x96xf32, #tpu.memory_space<vmem>>, %arg8: memref<1x32x32xbf16, #tpu.memory_space<vmem>>, %arg9: memref<1x1x32xf32, #tpu.memory_space<vmem>>, %arg10: memref<1x1x32xf32, #tpu.memory_space<vmem>>, %arg11: memref<1x1x32xf32, #tpu.memory_space<vmem>>, %arg12: memref<1x32x64xbf16, #tpu.memory_space<vmem>>, %arg13: memref<1x1x64xf32, #tpu.memory_space<vmem>>, %arg14: memref<1x64x32xbf16, #tpu.memory_space<vmem>>, %arg15: memref<1x1x32xf32, #tpu.memory_space<vmem>>, %arg16: memref<16x32xf32, #tpu.memory_space<vmem>>) attributes {dimension_semantics = [#tpu.dimension_semantics<parallel>, #tpu.dimension_semantics<arbitrary>], iteration_bounds = array<i64: 1, 2>, scalar_prefetch = 0 : i64, scratch_operands = 0 : i64, tpu.core_type = #tpu.core_type<tc>, window_params = [{transform_indices = @transform_0, window_bounds = array<i64: 16, 32>}, {pipeline_mode = #tpu.pipeline_mode<synchronous>, transform_indices = @transform_1, window_bounds = array<i64: 16, 16>}, {transform_indices = @transform_2, window_bounds = array<i64: 1, 1, 32>}, {transform_indices = @transform_3, window_bounds = array<i64: 1, 1, 32>}, {transform_indices = @transform_4, window_bounds = array<i64: 1, 32, 96>}, {transform_indices = @transform_5, window_bounds = array<i64: 1, 1, 96>}, {transform_indices = @transform_6, window_bounds = array<i64: 1, 32, 32>}, {transform_indices = @transform_7, window_bounds = array<i64: 1, 1, 32>}, {transform_indices = @transform_8, window_bounds = array<i64: 1, 1, 32>}, {transform_indices = @transform_9, window_bounds = array<i64: 1, 1, 32>}, {transform_indices = @transform_10, window_bounds = array<i64: 1, 32, 64>}, {transform_indices = @transform_11, window_bounds = array<i64: 1, 1, 64>}, {transform_indices = @transform_12, window_bounds = array<i64: 1, 64, 32>}, {transform_indices = @transform_13, window_bounds = array<i64: 1, 1, 32>}, {transform_indices = @transform_14, window_bounds = array<i64: 16, 32>}]} {
    %c0_i32 = arith.constant 0 : i32
    %0 = arith.cmpi eq, %arg1, %c0_i32 : i32
    %1 = arith.extui %0 : i1 to i32
    %c0_i32_0 = arith.constant 0 : i32
    %2 = arith.cmpi ne, %1, %c0_i32_0 : i32
    scf.if %2 {
      %c0_61 = arith.constant 0 : index
      %c0_62 = arith.constant 0 : index
      %153 = vector.load %arg2[%c0_61, %c0_62] : memref<16x32xf32, #tpu.memory_space<vmem>>, vector<16x32xf32>
      %c0_63 = arith.constant 0 : index
      %c0_64 = arith.constant 0 : index
      %154 = vector.load %arg16[%c0_63, %c0_64] : memref<16x32xf32, #tpu.memory_space<vmem>>, vector<16x32xf32>
      tpu.vector_store %arg16[%c0_63, %c0_64], %153 {strides = array<i32>} : memref<16x32xf32, #tpu.memory_space<vmem>>, vector<16x32xf32>,
    } else {
    }
    %c0 = arith.constant 0 : index
    %c0_1 = arith.constant 0 : index
    %3 = vector.load %arg16[%c0, %c0_1] : memref<16x32xf32, #tpu.memory_space<vmem>>, vector<16x32xf32>
    %c0_2 = arith.constant 0 : index
    %c0_3 = arith.constant 0 : index
    %c0_4 = arith.constant 0 : index
    %4 = vector.load %arg4[%c0_2, %c0_3, %c0_4] : memref<1x1x32xf32, #tpu.memory_space<vmem>>, vector<1x1x32xf32>
    %5 = vector.shape_cast %4 : vector<1x1x32xf32> to vector<1x32xf32>
    %c0_5 = arith.constant 0 : index
    %c0_6 = arith.constant 0 : index
    %c0_7 = arith.constant 0 : index
    %6 = vector.load %arg5[%c0_5, %c0_6, %c0_7] : memref<1x1x32xf32, #tpu.memory_space<vmem>>, vector<1x1x32xf32>
    %7 = vector.shape_cast %6 : vector<1x1x32xf32> to vector<1x32xf32>
    %c0_8 = arith.constant 0 : index
    %c0_9 = arith.constant 0 : index
    %c0_10 = arith.constant 0 : index
    %8 = vector.load %arg10[%c0_8, %c0_9, %c0_10] : memref<1x1x32xf32, #tpu.memory_space<vmem>>, vector<1x1x32xf32>
    %9 = vector.shape_cast %8 : vector<1x1x32xf32> to vector<1x32xf32>
    %c0_11 = arith.constant 0 : index
    %c0_12 = arith.constant 0 : index
    %c0_13 = arith.constant 0 : index
    %10 = vector.load %arg11[%c0_11, %c0_12, %c0_13] : memref<1x1x32xf32, #tpu.memory_space<vmem>>, vector<1x1x32xf32>
    %11 = vector.shape_cast %10 : vector<1x1x32xf32> to vector<1x32xf32>
    %c0_14 = arith.constant 0 : index
    %c0_15 = arith.constant 0 : index
    %c0_16 = arith.constant 0 : index
    %12 = vector.load %arg7[%c0_14, %c0_15, %c0_16] : memref<1x1x96xf32, #tpu.memory_space<vmem>>, vector<1x1x96xf32>
    %13 = vector.shape_cast %12 : vector<1x1x96xf32> to vector<1x96xf32>
    %c0_17 = arith.constant 0 : index
    %c0_18 = arith.constant 0 : index
    %c0_19 = arith.constant 0 : index
    %14 = vector.load %arg9[%c0_17, %c0_18, %c0_19] : memref<1x1x32xf32, #tpu.memory_space<vmem>>, vector<1x1x32xf32>
    %15 = vector.shape_cast %14 : vector<1x1x32xf32> to vector<1x32xf32>
    %c0_20 = arith.constant 0 : index
    %c0_21 = arith.constant 0 : index
    %c0_22 = arith.constant 0 : index
    %16 = vector.load %arg13[%c0_20, %c0_21, %c0_22] : memref<1x1x64xf32, #tpu.memory_space<vmem>>, vector<1x1x64xf32>
    %17 = vector.shape_cast %16 : vector<1x1x64xf32> to vector<1x64xf32>
    %c0_23 = arith.constant 0 : index
    %c0_24 = arith.constant 0 : index
    %c0_25 = arith.constant 0 : index
    %18 = vector.load %arg15[%c0_23, %c0_24, %c0_25] : memref<1x1x32xf32, #tpu.memory_space<vmem>>, vector<1x1x32xf32>
    %19 = vector.shape_cast %18 : vector<1x1x32xf32> to vector<1x32xf32>
    %c0_26 = arith.constant 0 : index
    %c0_27 = arith.constant 0 : index
    %20 = vector.load %arg3[%c0_26, %c0_27] : memref<16x16xf32, #tpu.memory_space<vmem>>, vector<16x16xf32>
    %cst = arith.constant dense<0.000000e+00> : vector<16xf32>
    %21 = vector.multi_reduction <add>, %3, %cst [1] : vector<16x32xf32> to vector<16xf32>
    %22 = vector.shape_cast %21 : vector<16xf32> to vector<16x1xf32>
    %cst_28 = arith.constant 3.200000e+01 : f32
    %23 = vector.broadcast %cst_28 : f32 to vector<16x1xf32>
    %24 = arith.divf %22, %23 : vector<16x1xf32>
    %25 = vector.broadcast %24 : vector<16x1xf32> to vector<16x32xf32>
    %26 = arith.subf %3, %25 : vector<16x32xf32>
    %27 = arith.mulf %26, %26 : vector<16x32xf32>
    %cst_29 = arith.constant dense<0.000000e+00> : vector<16xf32>
    %28 = vector.multi_reduction <add>, %27, %cst_29 [1] : vector<16x32xf32> to vector<16xf32>
    %29 = vector.shape_cast %28 : vector<16xf32> to vector<16x1xf32>
    %cst_30 = arith.constant 3.200000e+01 : f32
    %30 = vector.broadcast %cst_30 : f32 to vector<16x1xf32>
    %31 = arith.divf %29, %30 : vector<16x1xf32>
    %32 = vector.broadcast %24 : vector<16x1xf32> to vector<16x32xf32>
    %33 = arith.subf %3, %32 : vector<16x32xf32>
    %cst_31 = arith.constant 9.99999997E-7 : f32
    %34 = vector.broadcast %cst_31 : f32 to vector<16x1xf32>
    %35 = arith.addf %31, %34 : vector<16x1xf32>
    %36 = math.rsqrt %35 : vector<16x1xf32>
    %37 = vector.broadcast %36 : vector<16x1xf32> to vector<16x32xf32>
    %38 = arith.mulf %33, %37 : vector<16x32xf32>
    %39 = vector.broadcast %5 : vector<1x32xf32> to vector<16x32xf32>
    %40 = arith.mulf %38, %39 : vector<16x32xf32>
    %41 = vector.broadcast %7 : vector<1x32xf32> to vector<16x32xf32>
    %42 = arith.addf %40, %41 : vector<16x32xf32>
    %43 = arith.truncf %42 : vector<16x32xf32> to vector<16x32xbf16>
    %c0_32 = arith.constant 0 : index
    %c0_33 = arith.constant 0 : index
    %c0_34 = arith.constant 0 : index
    %44 = vector.load %arg6[%c0_32, %c0_33, %c0_34] : memref<1x32x96xbf16, #tpu.memory_space<vmem>>, vector<1x32x96xbf16>
    %45 = vector.shape_cast %44 : vector<1x32x96xbf16> to vector<32x96xbf16>
    %cst_35 = arith.constant dense<0.000000e+00> : vector<16x96xf32>
    %46 = tpu.matmul %43, %45, %cst_35 {dimension_numbers = #tpu.dot_dimension_numbers<[1], [0], [0], [1], [0, 0, 1, 1], [], []>} : vector<16x32xbf16>, vector<32x96xbf16>, vector<16x96xf32> -> vector<16x96xf32>
    %47 = vector.broadcast %13 : vector<1x96xf32> to vector<16x96xf32>
    %48 = arith.addf %46, %47 : vector<16x96xf32>
    %49 = arith.truncf %48 : vector<16x96xf32> to vector<16x96xbf16>
    %50 = vector.extract_strided_slice %49 {offsets = [0, 0], sizes = [16, 8], strides = [1, 1]} : vector<16x96xbf16> to vector<16x8xbf16>
    %51 = vector.extract_strided_slice %49 {offsets = [0, 8], sizes = [16, 8], strides = [1, 1]} : vector<16x96xbf16> to vector<16x8xbf16>
    %52 = vector.extract_strided_slice %49 {offsets = [0, 16], sizes = [16, 8], strides = [1, 1]} : vector<16x96xbf16> to vector<16x8xbf16>
    %53 = vector.extract_strided_slice %49 {offsets = [0, 24], sizes = [16, 8], strides = [1, 1]} : vector<16x96xbf16> to vector<16x8xbf16>
    %54 = vector.shape_cast %50 : vector<16x8xbf16> to vector<1x16x8xbf16>
    %55 = vector.shape_cast %51 : vector<16x8xbf16> to vector<1x16x8xbf16>
    %56 = vector.shape_cast %52 : vector<16x8xbf16> to vector<1x16x8xbf16>
    %57 = vector.shape_cast %53 : vector<16x8xbf16> to vector<1x16x8xbf16>
    %58 = tpu.concatenate %54, %55, %56, %57 in 0 : vector<1x16x8xbf16>, vector<1x16x8xbf16>, vector<1x16x8xbf16>, vector<1x16x8xbf16> -> vector<4x16x8xbf16>
    %59 = vector.extract_strided_slice %49 {offsets = [0, 32], sizes = [16, 8], strides = [1, 1]} : vector<16x96xbf16> to vector<16x8xbf16>
    %60 = vector.extract_strided_slice %49 {offsets = [0, 40], sizes = [16, 8], strides = [1, 1]} : vector<16x96xbf16> to vector<16x8xbf16>
    %61 = vector.extract_strided_slice %49 {offsets = [0, 48], sizes = [16, 8], strides = [1, 1]} : vector<16x96xbf16> to vector<16x8xbf16>
    %62 = vector.extract_strided_slice %49 {offsets = [0, 56], sizes = [16, 8], strides = [1, 1]} : vector<16x96xbf16> to vector<16x8xbf16>
    %63 = vector.shape_cast %59 : vector<16x8xbf16> to vector<1x16x8xbf16>
    %64 = vector.shape_cast %60 : vector<16x8xbf16> to vector<1x16x8xbf16>
    %65 = vector.shape_cast %61 : vector<16x8xbf16> to vector<1x16x8xbf16>
    %66 = vector.shape_cast %62 : vector<16x8xbf16> to vector<1x16x8xbf16>
    %67 = tpu.concatenate %63, %64, %65, %66 in 0 : vector<1x16x8xbf16>, vector<1x16x8xbf16>, vector<1x16x8xbf16>, vector<1x16x8xbf16> -> vector<4x16x8xbf16>
    %68 = vector.extract_strided_slice %49 {offsets = [0, 64], sizes = [16, 8], strides = [1, 1]} : vector<16x96xbf16> to vector<16x8xbf16>
    %69 = vector.extract_strided_slice %49 {offsets = [0, 72], sizes = [16, 8], strides = [1, 1]} : vector<16x96xbf16> to vector<16x8xbf16>
    %70 = vector.extract_strided_slice %49 {offsets = [0, 80], sizes = [16, 8], strides = [1, 1]} : vector<16x96xbf16> to vector<16x8xbf16>
    %71 = vector.extract_strided_slice %49 {offsets = [0, 88], sizes = [16, 8], strides = [1, 1]} : vector<16x96xbf16> to vector<16x8xbf16>
    %72 = vector.shape_cast %68 : vector<16x8xbf16> to vector<1x16x8xbf16>
    %73 = vector.shape_cast %69 : vector<16x8xbf16> to vector<1x16x8xbf16>
    %74 = vector.shape_cast %70 : vector<16x8xbf16> to vector<1x16x8xbf16>
    %75 = vector.shape_cast %71 : vector<16x8xbf16> to vector<1x16x8xbf16>
    %76 = tpu.concatenate %72, %73, %74, %75 in 0 : vector<1x16x8xbf16>, vector<1x16x8xbf16>, vector<1x16x8xbf16>, vector<1x16x8xbf16> -> vector<4x16x8xbf16>
    "tpu.trace_start"() <{level = 10 : i32, message = "hnd,hmd->hnm"}> : () -> ()
    %cst_36 = arith.constant dense<0.000000e+00> : vector<4x16x16xf32>
    %77 = tpu.matmul %58, %67, %cst_36 {dimension_numbers = #tpu.dot_dimension_numbers<[2], [2], [1], [1], [0, 0, 0, 1, 1, 1], [0], [0]>} : vector<4x16x8xbf16>, vector<4x16x8xbf16>, vector<4x16x16xf32> -> vector<4x16x16xf32>
    "tpu.trace_stop"() : () -> ()
    %78 = vector.shape_cast %20 : vector<16x16xf32> to vector<1x16x16xf32>
    %79 = vector.broadcast %78 : vector<1x16x16xf32> to vector<4x16x16xf32>
    %80 = arith.addf %77, %79 : vector<4x16x16xf32>
    %cst_37 = arith.constant dense<0xFF800000> : vector<4x16xf32>
    %81 = vector.multi_reduction <maximumf>, %80, %cst_37 [2] : vector<4x16x16xf32> to vector<4x16xf32>
    %82 = vector.shape_cast %81 : vector<4x16xf32> to vector<4x16x1xf32>
    %83 = vector.broadcast %82 : vector<4x16x1xf32> to vector<4x16x16xf32>
    %84 = arith.subf %80, %83 : vector<4x16x16xf32>
    %85 = math.exp %84 : vector<4x16x16xf32>
    %cst_38 = arith.constant dense<0.000000e+00> : vector<4x16xf32>
    %86 = vector.multi_reduction <add>, %85, %cst_38 [2] : vector<4x16x16xf32> to vector<4x16xf32>
    %87 = vector.shape_cast %86 : vector<4x16xf32> to vector<4x16x1xf32>
    %88 = tpu.reciprocal %87 {approx = true} : vector<4x16x1xf32> -> vector<4x16x1xf32>
    %89 = vector.broadcast %88 : vector<4x16x1xf32> to vector<4x16x16xf32>
    %90 = arith.mulf %85, %89 : vector<4x16x16xf32>
    %91 = arith.truncf %90 : vector<4x16x16xf32> to vector<4x16x16xbf16>
    "tpu.trace_start"() <{level = 10 : i32, message = "hnm,hmd->hnd"}> : () -> ()
    %cst_39 = arith.constant dense<0.000000e+00> : vector<4x16x8xf32>
    %92 = tpu.matmul %91, %76, %cst_39 {dimension_numbers = #tpu.dot_dimension_numbers<[2], [1], [1], [2], [0, 0, 0, 1, 1, 2], [0], [0]>} : vector<4x16x16xbf16>, vector<4x16x8xbf16>, vector<4x16x8xf32> -> vector<4x16x8xf32>
    "tpu.trace_stop"() : () -> ()
    %93 = vector.extract_strided_slice %92 {offsets = [0, 0, 0], sizes = [1, 16, 8], strides = [1, 1, 1]} : vector<4x16x8xf32> to vector<1x16x8xf32>
    %94 = vector.shape_cast %93 : vector<1x16x8xf32> to vector<16x8xf32>
    %95 = vector.extract_strided_slice %92 {offsets = [1, 0, 0], sizes = [1, 16, 8], strides = [1, 1, 1]} : vector<4x16x8xf32> to vector<1x16x8xf32>
    %96 = vector.shape_cast %95 : vector<1x16x8xf32> to vector<16x8xf32>
    %97 = vector.extract_strided_slice %92 {offsets = [2, 0, 0], sizes = [1, 16, 8], strides = [1, 1, 1]} : vector<4x16x8xf32> to vector<1x16x8xf32>
    %98 = vector.shape_cast %97 : vector<1x16x8xf32> to vector<16x8xf32>
    %99 = vector.extract_strided_slice %92 {offsets = [3, 0, 0], sizes = [1, 16, 8], strides = [1, 1, 1]} : vector<4x16x8xf32> to vector<1x16x8xf32>
    %100 = vector.shape_cast %99 : vector<1x16x8xf32> to vector<16x8xf32>
    %101 = tpu.concatenate %94, %96, %98, %100 in 1 : vector<16x8xf32>, vector<16x8xf32>, vector<16x8xf32>, vector<16x8xf32> -> vector<16x32xf32>
    %102 = arith.truncf %101 : vector<16x32xf32> to vector<16x32xbf16>
    %c0_40 = arith.constant 0 : index
    %c0_41 = arith.constant 0 : index
    %c0_42 = arith.constant 0 : index
    %103 = vector.load %arg8[%c0_40, %c0_41, %c0_42] : memref<1x32x32xbf16, #tpu.memory_space<vmem>>, vector<1x32x32xbf16>
    %104 = vector.shape_cast %103 : vector<1x32x32xbf16> to vector<32x32xbf16>
    %cst_43 = arith.constant dense<0.000000e+00> : vector<16x32xf32>
    %105 = tpu.matmul %102, %104, %cst_43 {dimension_numbers = #tpu.dot_dimension_numbers<[1], [0], [0], [1], [0, 0, 1, 1], [], []>} : vector<16x32xbf16>, vector<32x32xbf16>, vector<16x32xf32> -> vector<16x32xf32>
    %106 = vector.broadcast %15 : vector<1x32xf32> to vector<16x32xf32>
    %107 = arith.addf %105, %106 : vector<16x32xf32>
    %108 = arith.addf %3, %107 : vector<16x32xf32>
    %cst_44 = arith.constant dense<0.000000e+00> : vector<16xf32>
    %109 = vector.multi_reduction <add>, %108, %cst_44 [1] : vector<16x32xf32> to vector<16xf32>
    %110 = vector.shape_cast %109 : vector<16xf32> to vector<16x1xf32>
    %cst_45 = arith.constant 3.200000e+01 : f32
    %111 = vector.broadcast %cst_45 : f32 to vector<16x1xf32>
    %112 = arith.divf %110, %111 : vector<16x1xf32>
    %113 = vector.broadcast %112 : vector<16x1xf32> to vector<16x32xf32>
    %114 = arith.subf %108, %113 : vector<16x32xf32>
    %115 = arith.mulf %114, %114 : vector<16x32xf32>
    %cst_46 = arith.constant dense<0.000000e+00> : vector<16xf32>
    %116 = vector.multi_reduction <add>, %115, %cst_46 [1] : vector<16x32xf32> to vector<16xf32>
    %117 = vector.shape_cast %116 : vector<16xf32> to vector<16x1xf32>
    %cst_47 = arith.constant 3.200000e+01 : f32
    %118 = vector.broadcast %cst_47 : f32 to vector<16x1xf32>
    %119 = arith.divf %117, %118 : vector<16x1xf32>
    %120 = vector.broadcast %112 : vector<16x1xf32> to vector<16x32xf32>
    %121 = arith.subf %108, %120 : vector<16x32xf32>
    %cst_48 = arith.constant 9.99999997E-7 : f32
    %122 = vector.broadcast %cst_48 : f32 to vector<16x1xf32>
    %123 = arith.addf %119, %122 : vector<16x1xf32>
    %124 = math.rsqrt %123 : vector<16x1xf32>
    %125 = vector.broadcast %124 : vector<16x1xf32> to vector<16x32xf32>
    %126 = arith.mulf %121, %125 : vector<16x32xf32>
    %127 = vector.broadcast %9 : vector<1x32xf32> to vector<16x32xf32>
    %128 = arith.mulf %126, %127 : vector<16x32xf32>
    %129 = vector.broadcast %11 : vector<1x32xf32> to vector<16x32xf32>
    %130 = arith.addf %128, %129 : vector<16x32xf32>
    %131 = arith.truncf %130 : vector<16x32xf32> to vector<16x32xbf16>
    %c0_49 = arith.constant 0 : index
    %c0_50 = arith.constant 0 : index
    %c0_51 = arith.constant 0 : index
    %132 = vector.load %arg12[%c0_49, %c0_50, %c0_51] : memref<1x32x64xbf16, #tpu.memory_space<vmem>>, vector<1x32x64xbf16>
    %133 = vector.shape_cast %132 : vector<1x32x64xbf16> to vector<32x64xbf16>
    %cst_52 = arith.constant dense<0.000000e+00> : vector<16x64xf32>
    %134 = tpu.matmul %131, %133, %cst_52 {dimension_numbers = #tpu.dot_dimension_numbers<[1], [0], [0], [1], [0, 0, 1, 1], [], []>} : vector<16x32xbf16>, vector<32x64xbf16>, vector<16x64xf32> -> vector<16x64xf32>
    %135 = vector.broadcast %17 : vector<1x64xf32> to vector<16x64xf32>
    %136 = arith.addf %134, %135 : vector<16x64xf32>
    %cst_53 = arith.constant 1.702000e+00 : f32
    %137 = vector.broadcast %cst_53 : f32 to vector<16x64xf32>
    %138 = arith.mulf %137, %136 : vector<16x64xf32>
    %139 = arith.negf %138 : vector<16x64xf32>
    %140 = math.exp %139 : vector<16x64xf32>
    %cst_54 = arith.constant 1.000000e+00 : f32
    %141 = vector.broadcast %cst_54 : f32 to vector<16x64xf32>
    %142 = arith.addf %141, %140 : vector<16x64xf32>
    %143 = arith.divf %141, %142 : vector<16x64xf32>
    %144 = arith.mulf %136, %143 : vector<16x64xf32>
    %145 = arith.truncf %144 : vector<16x64xf32> to vector<16x64xbf16>
    %c0_55 = arith.constant 0 : index
    %c0_56 = arith.constant 0 : index
    %c0_57 = arith.constant 0 : index
    %146 = vector.load %arg14[%c0_55, %c0_56, %c0_57] : memref<1x64x32xbf16, #tpu.memory_space<vmem>>, vector<1x64x32xbf16>
    %147 = vector.shape_cast %146 : vector<1x64x32xbf16> to vector<64x32xbf16>
    %cst_58 = arith.constant dense<0.000000e+00> : vector<16x32xf32>
    %148 = tpu.matmul %145, %147, %cst_58 {dimension_numbers = #tpu.dot_dimension_numbers<[1], [0], [0], [1], [0, 0, 1, 1], [], []>} : vector<16x64xbf16>, vector<64x32xbf16>, vector<16x32xf32> -> vector<16x32xf32>
    %149 = vector.broadcast %19 : vector<1x32xf32> to vector<16x32xf32>
    %150 = arith.addf %148, %149 : vector<16x32xf32>
    %151 = arith.addf %108, %150 : vector<16x32xf32>
    %c0_59 = arith.constant 0 : index
    %c0_60 = arith.constant 0 : index
    %152 = vector.load %arg16[%c0_59, %c0_60] : memref<16x32xf32, #tpu.memory_space<vmem>>, vector<16x32xf32>
    tpu.vector_store %arg16[%c0_59, %c0_60], %151 {strides = array<i32>} : memref<16x32xf32, #tpu.memory_space<vmem>>, vector<16x32xf32>,
    return
  }
  func.func @transform_0(%arg0: i32, %arg1: i32) -> (i32, i32) {
    %c0_i32 = arith.constant 0 : i32
    %c0_i32_0 = arith.constant 0 : i32
    return %arg0, %c0_i32 : i32, i32
  }
  func.func @transform_1(%arg0: i32, %arg1: i32) -> (i32, i32) {
    %c0_i32 = arith.constant 0 : i32
    %c0_i32_0 = arith.constant 0 : i32
    %c0_i32_1 = arith.constant 0 : i32
    return %c0_i32, %c0_i32_0 : i32, i32
  }
  func.func @transform_2(%arg0: i32, %arg1: i32) -> (i32, i32, i32) {
    %c0_i32 = arith.constant 0 : i32
    %c0_i32_0 = arith.constant 0 : i32
    %c0_i32_1 = arith.constant 0 : i32
    return %arg1, %c0_i32, %c0_i32_0 : i32, i32, i32
  }
  func.func @transform_3(%arg0: i32, %arg1: i32) -> (i32, i32, i32) {
    %c0_i32 = arith.constant 0 : i32
    %c0_i32_0 = arith.constant 0 : i32
    %c0_i32_1 = arith.constant 0 : i32
    return %arg1, %c0_i32, %c0_i32_0 : i32, i32, i32
  }
  func.func @transform_4(%arg0: i32, %arg1: i32) -> (i32, i32, i32) {
    %c0_i32 = arith.constant 0 : i32
    %c0_i32_0 = arith.constant 0 : i32
    %c0_i32_1 = arith.constant 0 : i32
    return %arg1, %c0_i32, %c0_i32_0 : i32, i32, i32
  }
  func.func @transform_5(%arg0: i32, %arg1: i32) -> (i32, i32, i32) {
    %c0_i32 = arith.constant 0 : i32
    %c0_i32_0 = arith.constant 0 : i32
    %c0_i32_1 = arith.constant 0 : i32
    return %arg1, %c0_i32, %c0_i32_0 : i32, i32, i32
  }
  func.func @transform_6(%arg0: i32, %arg1: i32) -> (i32, i32, i32) {
    %c0_i32 = arith.constant 0 : i32
    %c0_i32_0 = arith.constant 0 : i32
    %c0_i32_1 = arith.constant 0 : i32
    return %arg1, %c0_i32, %c0_i32_0 : i32, i32, i32
  }
  func.func @transform_7(%arg0: i32, %arg1: i32) -> (i32, i32, i32) {
    %c0_i32 = arith.constant 0 : i32
    %c0_i32_0 = arith.constant 0 : i32
    %c0_i32_1 = arith.constant 0 : i32
    return %arg1, %c0_i32, %c0_i32_0 : i32, i32, i32
  }
  func.func @transform_8(%arg0: i32, %arg1: i32) -> (i32, i32, i32) {
    %c0_i32 = arith.constant 0 : i32
    %c0_i32_0 = arith.constant 0 : i32
    %c0_i32_1 = arith.constant 0 : i32
    return %arg1, %c0_i32, %c0_i32_0 : i32, i32, i32
  }
  func.func @transform_9(%arg0: i32, %arg1: i32) -> (i32, i32, i32) {
    %c0_i32 = arith.constant 0 : i32
    %c0_i32_0 = arith.constant 0 : i32
    %c0_i32_1 = arith.constant 0 : i32
    return %arg1, %c0_i32, %c0_i32_0 : i32, i32, i32
  }
  func.func @transform_10(%arg0: i32, %arg1: i32) -> (i32, i32, i32) {
    %c0_i32 = arith.constant 0 : i32
    %c0_i32_0 = arith.constant 0 : i32
    %c0_i32_1 = arith.constant 0 : i32
    return %arg1, %c0_i32, %c0_i32_0 : i32, i32, i32
  }
  func.func @transform_11(%arg0: i32, %arg1: i32) -> (i32, i32, i32) {
    %c0_i32 = arith.constant 0 : i32
    %c0_i32_0 = arith.constant 0 : i32
    %c0_i32_1 = arith.constant 0 : i32
    return %arg1, %c0_i32, %c0_i32_0 : i32, i32, i32
  }
  func.func @transform_12(%arg0: i32, %arg1: i32) -> (i32, i32, i32) {
    %c0_i32 = arith.constant 0 : i32
    %c0_i32_0 = arith.constant 0 : i32
    %c0_i32_1 = arith.constant 0 : i32
    return %arg1, %c0_i32, %c0_i32_0 : i32, i32, i32
  }
  func.func @transform_13(%arg0: i32, %arg1: i32) -> (i32, i32, i32) {
    %c0_i32 = arith.constant 0 : i32
    %c0_i32_0 = arith.constant 0 : i32
    %c0_i32_1 = arith.constant 0 : i32
    return %arg1, %c0_i32, %c0_i32_0 : i32, i32, i32
  }
  func.func @transform_14(%arg0: i32, %arg1: i32) -> (i32, i32) {
    %c0_i32 = arith.constant 0 : i32
    %c0_i32_0 = arith.constant 0 : i32
    return %arg0, %c0_i32 : i32, i32
  }
}

</mosaic_0001>

<llo_original>
// kernel: tpu_custom_call.1
$region0: #{tpu_custom_call.1}
  #allocation0 [shape = 'u32[]', space=smem, size = 0x4, offset = 0x4, fixed_abs, tag = 'smem constant byte address 0x4 - core index']
  #allocation1 [shape = 'u32[144,128]{1,0:T(1,128)}', space=vmem, size = 0x12000, scoped, tag = 'internal scratch']
  %s0 = inlined_call_operand.hbm [shape: f32[16,32], index: 0, kind: input, shape index: {}]
  %s1 = inlined_call_operand.hbm [shape: f32[16,16], index: 1, kind: input, shape index: {}]
  %s2 = inlined_call_operand.vmem [shape: f32[2,1,32], index: 2, kind: input, shape index: {}]
  %s3 = inlined_call_operand.vmem [shape: f32[2,1,32], index: 3, kind: input, shape index: {}]
  %s4 = inlined_call_operand.vmem [shape: bf16[2,32,96], index: 4, kind: input, shape index: {}]
  %s5 = inlined_call_operand.vmem [shape: f32[2,1,96], index: 5, kind: input, shape index: {}]
  %s6 = inlined_call_operand.vmem [shape: bf16[2,32,32], index: 6, kind: input, shape index: {}]
  %s7 = inlined_call_operand.vmem [shape: f32[2,1,32], index: 7, kind: input, shape index: {}]
  %s8 = inlined_call_operand.vmem [shape: f32[2,1,32], index: 8, kind: input, shape index: {}]
  %s9 = inlined_call_operand.vmem [shape: f32[2,1,32], index: 9, kind: input, shape index: {}]
  %s10 = inlined_call_operand.vmem [shape: bf16[2,32,64], index: 10, kind: input, shape index: {}]
  %s11 = inlined_call_operand.vmem [shape: f32[2,1,64], index: 11, kind: input, shape index: {}]
  %s12 = inlined_call_operand.vmem [shape: bf16[2,64,32], index: 12, kind: input, shape index: {}]
  %s13 = inlined_call_operand.vmem [shape: f32[2,1,32], index: 13, kind: input, shape index: {}]
  %s14 = inlined_call_operand.hbm [shape: f32[16,32], index: 14, kind: output, shape index: {}]
  %s15 = sld [smem:[#allocation0]]
  $region101: #{tpu_custom_call.1} parent=0
    _
  %s17 = ssub.s32 1, %s15
  %s18 = scalar_select 0, %s17, %s15
  $region1: #{tpu_custom_call.1} parent=0
    #allocation2 [shape = 'u8[8192]{0}', space=vmem, size = 0x2000, scoped, tag = 'input window, operand 0, single buffered']
    #allocation3 [shape = 's32[2]{0}', space=sflag, size = 0x8, scoped, tag = 'scoped memory for tpu_custom_call.1']
    #allocation4 [shape = 's32[2]{0}', space=sflag, size = 0x8, scoped, tag = 'scoped memory for tpu_custom_call.1']
    #allocation5 [shape = 'u8[8192]{0}', space=vmem, size = 0x2000, scoped, tag = 'input window, operand 1, single buffered']
    #allocation6 [shape = 's32[1]{0}', space=sflag, size = 0x4, scoped, tag = 'scoped memory for tpu_custom_call.1']
    #allocation7 [shape = 'u8[8192]{0}', space=vmem, size = 0x2000, scoped, tag = 'output window, operand 0, single buffered']
    %19 = vsyncpa [#allocation3], 0
    %20 = vsyncpa [#allocation6], 0
    %21 = vsyncpa [#allocation4], 0
    loop: start=0, step=1, limit=4
    $region2: #{tpu_custom_call.1} parent=1 // loop_pre_header
      _
    $region3: #{tpu_custom_call.1} parent=1 // loop_header
      %s23 = sphi 0, %s27
      %p24 = scmp.ge.s32.totalorder %s23, 4
      %s30 = sphi 0, %s42
      %s31 = sphi 0, %s38
      %s32 = sphi 0, %s30
      %s33 = sphi 0, %s31
      %s34 = sphi 0, %s32
      %s35 = sphi 0, %s33
      %s45 = sphi 0, %s47
      %s48 = sphi 0, %s45
      %s49 = sphi 0, %s48
      %s65 = sphi 0, %s49
      %s69 = sphi 0, %s69
      %s71 = sphi 0, %s69
      %s72 = sphi 0, %s71
      %s86 = sphi 0, %s72
      %s92 = sphi 0, %s94
      %s95 = sphi 0, %s92
      %s96 = sphi 0, %s95
      %s112 = sphi 0, %s96
      %s118 = sphi 0, %s120
      %s121 = sphi 0, %s118
      %s122 = sphi 0, %s121
      %s138 = sphi 0, %s122
      %s144 = sphi 0, %s146
      %s147 = sphi 0, %s144
      %s148 = sphi 0, %s147
      %s164 = sphi 0, %s148
      %s170 = sphi 0, %s172
      %s173 = sphi 0, %s170
      %s174 = sphi 0, %s173
      %s190 = sphi 0, %s174
      %s196 = sphi 0, %s198
      %s199 = sphi 0, %s196
      %s200 = sphi 0, %s199
      %s216 = sphi 0, %s200
      %s222 = sphi 0, %s224
      %s225 = sphi 0, %s222
      %s226 = sphi 0, %s225
      %s242 = sphi 0, %s226
      %s248 = sphi 0, %s250
      %s251 = sphi 0, %s248
      %s252 = sphi 0, %s251
      %s268 = sphi 0, %s252
      %s274 = sphi 0, %s276
      %s277 = sphi 0, %s274
      %s278 = sphi 0, %s277
      %s294 = sphi 0, %s278
      %s300 = sphi 0, %s302
      %s303 = sphi 0, %s300
      %s304 = sphi 0, %s303
      %s320 = sphi 0, %s304
      %s326 = sphi 0, %s328
      %s329 = sphi 0, %s326
      %s330 = sphi 0, %s329
      %s346 = sphi 0, %s330
      %s352 = sphi 0, %s354
      %s355 = sphi 0, %s352
      %s356 = sphi 0, %s355
      %s372 = sphi 0, %s356
      %s378 = sphi 0, %s380
      %s381 = sphi 0, %s378
      %s382 = sphi 0, %s381
      %s398 = sphi 0, %s382
      %s404 = sphi 0, %s406
      %s407 = sphi 0, %s404
      %s408 = sphi 0, %s407
      %s424 = sphi 0, %s408
    $region4: #{tpu_custom_call.1} parent=1 // loop_header_branch
      %26 = sbr.rel (%p24) target = $region8
    $region5: #{tpu_custom_call.1} parent=1 // loop_body
      %s28 = ssub.s32 %s23, 1
      %s29 = ssub.s32 %s23, 2
      %s36 = sadd.s32 1, %s31
      %p37 = scmp.ge.s32.totalorder %s36, 2
      %s38 = scalar_select %p37, 0, %s36
      %s39 = sadd.s32 1, %s30
      %s40 = scalar_select %p37, %s39, %s30
      %p41 = scmp.ge.s32.totalorder %s40, 1
      %s42 = scalar_select %p41, 0, %s40
      %s43 = ssub.s32 %s30, %s42
      %p44 = scmp.eq.s32.totalorder %s43, 0
      %s46 = sadd.s32 %s45, 1
      %s47 = scalar_select %p44, %s45, %s46
      %p50 = pneg %p44
      %p51 = scmp.eq.s32.totalorder %s23, 1
      %p52 = por %p50, %p51
      %p53 = scmp.ne.s32.totalorder %s45, %s48
      %p54 = scmp.eq.s32.totalorder %s23, 0
      %p55 = por %p53, %p54
      %p56 = scmp.ne.s32.totalorder %s45, %s48
      %p57 = scmp.eq.s32.totalorder %s28, 1
      %p58 = por %p56, %p57
      %p59 = scmp.ne.s32.totalorder %s48, %s49
      %p60 = scmp.eq.s32.totalorder %s28, 0
      %p61 = por %p59, %p60
      %p62 = scmp.ne.s32.totalorder %s48, %s49
      %p63 = scmp.eq.s32.totalorder %s29, 1
      %p64 = por %p62, %p63
      %p66 = scmp.ne.s32.totalorder %s49, %s65
      %p67 = scmp.eq.s32.totalorder %s29, 0
      %p68 = por %p66, %p67
      %s70 = sadd.s32 %s69, 1
      %p73 = scmp.eq.s32.totalorder %s23, 1
      %p74 = scmp.ne.s32.totalorder %s69, %s71
      %p75 = scmp.eq.s32.totalorder %s23, 0
      %p76 = por %p74, %p75
      %p77 = scmp.ne.s32.totalorder %s69, %s71
      %p78 = scmp.eq.s32.totalorder %s28, 1
      %p79 = por %p77, %p78
      %p80 = scmp.ne.s32.totalorder %s71, %s72
      %p81 = scmp.eq.s32.totalorder %s28, 0
      %p82 = por %p80, %p81
      %p83 = scmp.ne.s32.totalorder %s71, %s72
      %p84 = scmp.eq.s32.totalorder %s29, 1
      %p85 = por %p83, %p84
      %p87 = scmp.ne.s32.totalorder %s72, %s86
      %p88 = scmp.eq.s32.totalorder %s29, 0
      %p89 = por %p87, %p88
      %s90 = ssub.s32 %s31, %s38
      %p91 = scmp.eq.s32.totalorder %s90, 0
      %s93 = sadd.s32 %s92, 1
      %s94 = scalar_select %p91, %s92, %s93
      %p97 = pneg %p91
      %p98 = scmp.eq.s32.totalorder %s23, 1
      %p99 = por %p97, %p98
      %p100 = scmp.ne.s32.totalorder %s92, %s95
      %p101 = scmp.eq.s32.totalorder %s23, 0
      %p102 = por %p100, %p101
      %p103 = scmp.ne.s32.totalorder %s92, %s95
      %p104 = scmp.eq.s32.totalorder %s28, 1
      %p105 = por %p103, %p104
      %p106 = scmp.ne.s32.totalorder %s95, %s96
      %p107 = scmp.eq.s32.totalorder %s28, 0
      %p108 = por %p106, %p107
      %p109 = scmp.ne.s32.totalorder %s95, %s96
      %p110 = scmp.eq.s32.totalorder %s29, 1
      %p111 = por %p109, %p110
      %p113 = scmp.ne.s32.totalorder %s96, %s112
      %p114 = scmp.eq.s32.totalorder %s29, 0
      %p115 = por %p113, %p114
      %s116 = ssub.s32 %s31, %s38
      %p117 = scmp.eq.s32.totalorder %s116, 0
      %s119 = sadd.s32 %s118, 1
      %s120 = scalar_select %p117, %s118, %s119
      %p123 = pneg %p117
      %p124 = scmp.eq.s32.totalorder %s23, 1
      %p125 = por %p123, %p124
      %p126 = scmp.ne.s32.totalorder %s118, %s121
      %p127 = scmp.eq.s32.totalorder %s23, 0
      %p128 = por %p126, %p127
      %p129 = scmp.ne.s32.totalorder %s118, %s121
      %p130 = scmp.eq.s32.totalorder %s28, 1
      %p131 = por %p129, %p130
      %p132 = scmp.ne.s32.totalorder %s121, %s122
      %p133 = scmp.eq.s32.totalorder %s28, 0
      %p134 = por %p132, %p133
      %p135 = scmp.ne.s32.totalorder %s121, %s122
      %p136 = scmp.eq.s32.totalorder %s29, 1
      %p137 = por %p135, %p136
      %p139 = scmp.ne.s32.totalorder %s122, %s138
      %p140 = scmp.eq.s32.totalorder %s29, 0
      %p141 = por %p139, %p140
      %s142 = ssub.s32 %s31, %s38
      %p143 = scmp.eq.s32.totalorder %s142, 0
      %s145 = sadd.s32 %s144, 1
      %s146 = scalar_select %p143, %s144, %s145
      %p149 = pneg %p143
      %p150 = scmp.eq.s32.totalorder %s23, 1
      %p151 = por %p149, %p150
      %p152 = scmp.ne.s32.totalorder %s144, %s147
      %p153 = scmp.eq.s32.totalorder %s23, 0
      %p154 = por %p152, %p153
      %p155 = scmp.ne.s32.totalorder %s144, %s147
      %p156 = scmp.eq.s32.totalorder %s28, 1
      %p157 = por %p155, %p156
      %p158 = scmp.ne.s32.totalorder %s147, %s148
      %p159 = scmp.eq.s32.totalorder %s28, 0
      %p160 = por %p158, %p159
      %p161 = scmp.ne.s32.totalorder %s147, %s148
      %p162 = scmp.eq.s32.totalorder %s29, 1
      %p163 = por %p161, %p162
      %p165 = scmp.ne.s32.totalorder %s148, %s164
      %p166 = scmp.eq.s32.totalorder %s29, 0
      %p167 = por %p165, %p166
      %s168 = ssub.s32 %s31, %s38
      %p169 = scmp.eq.s32.totalorder %s168, 0
      %s171 = sadd.s32 %s170, 1
      %s172 = scalar_select %p169, %s170, %s171
      %p175 = pneg %p169
      %p176 = scmp.eq.s32.totalorder %s23, 1
      %p177 = por %p175, %p176
      %p178 = scmp.ne.s32.totalorder %s170, %s173
      %p179 = scmp.eq.s32.totalorder %s23, 0
      %p180 = por %p178, %p179
      %p181 = scmp.ne.s32.totalorder %s170, %s173
      %p182 = scmp.eq.s32.totalorder %s28, 1
      %p183 = por %p181, %p182
      %p184 = scmp.ne.s32.totalorder %s173, %s174
      %p185 = scmp.eq.s32.totalorder %s28, 0
      %p186 = por %p184, %p185
      %p187 = scmp.ne.s32.totalorder %s173, %s174
      %p188 = scmp.eq.s32.totalorder %s29, 1
      %p189 = por %p187, %p188
      %p191 = scmp.ne.s32.totalorder %s174, %s190
      %p192 = scmp.eq.s32.totalorder %s29, 0
      %p193 = por %p191, %p192
      %s194 = ssub.s32 %s31, %s38
      %p195 = scmp.eq.s32.totalorder %s194, 0
      %s197 = sadd.s32 %s196, 1
      %s198 = scalar_select %p195, %s196, %s197
      %p201 = pneg %p195
      %p202 = scmp.eq.s32.totalorder %s23, 1
      %p203 = por %p201, %p202
      %p204 = scmp.ne.s32.totalorder %s196, %s199
      %p205 = scmp.eq.s32.totalorder %s23, 0
      %p206 = por %p204, %p205
      %p207 = scmp.ne.s32.totalorder %s196, %s199
      %p208 = scmp.eq.s32.totalorder %s28, 1
      %p209 = por %p207, %p208
      %p210 = scmp.ne.s32.totalorder %s199, %s200
      %p211 = scmp.eq.s32.totalorder %s28, 0
      %p212 = por %p210, %p211
      %p213 = scmp.ne.s32.totalorder %s199, %s200
      %p214 = scmp.eq.s32.totalorder %s29, 1
      %p215 = por %p213, %p214
      %p217 = scmp.ne.s32.totalorder %s200, %s216
      %p218 = scmp.eq.s32.totalorder %s29, 0
      %p219 = por %p217, %p218
      %s220 = ssub.s32 %s31, %s38
      %p221 = scmp.eq.s32.totalorder %s220, 0
      %s223 = sadd.s32 %s222, 1
      %s224 = scalar_select %p221, %s222, %s223
      %p227 = pneg %p221
      %p228 = scmp.eq.s32.totalorder %s23, 1
      %p229 = por %p227, %p228
      %p230 = scmp.ne.s32.totalorder %s222, %s225
      %p231 = scmp.eq.s32.totalorder %s23, 0
      %p232 = por %p230, %p231
      %p233 = scmp.ne.s32.totalorder %s222, %s225
      %p234 = scmp.eq.s32.totalorder %s28, 1
      %p235 = por %p233, %p234
      %p236 = scmp.ne.s32.totalorder %s225, %s226
      %p237 = scmp.eq.s32.totalorder %s28, 0
      %p238 = por %p236, %p237
      %p239 = scmp.ne.s32.totalorder %s225, %s226
      %p240 = scmp.eq.s32.totalorder %s29, 1
      %p241 = por %p239, %p240
      %p243 = scmp.ne.s32.totalorder %s226, %s242
      %p244 = scmp.eq.s32.totalorder %s29, 0
      %p245 = por %p243, %p244
      %s246 = ssub.s32 %s31, %s38
      %p247 = scmp.eq.s32.totalorder %s246, 0
      %s249 = sadd.s32 %s248, 1
      %s250 = scalar_select %p247, %s248, %s249
      %p253 = pneg %p247
      %p254 = scmp.eq.s32.totalorder %s23, 1
      %p255 = por %p253, %p254
      %p256 = scmp.ne.s32.totalorder %s248, %s251
      %p257 = scmp.eq.s32.totalorder %s23, 0
      %p258 = por %p256, %p257
      %p259 = scmp.ne.s32.totalorder %s248, %s251
      %p260 = scmp.eq.s32.totalorder %s28, 1
      %p261 = por %p259, %p260
      %p262 = scmp.ne.s32.totalorder %s251, %s252
      %p263 = scmp.eq.s32.totalorder %s28, 0
      %p264 = por %p262, %p263
      %p265 = scmp.ne.s32.totalorder %s251, %s252
      %p266 = scmp.eq.s32.totalorder %s29, 1
      %p267 = por %p265, %p266
      %p269 = scmp.ne.s32.totalorder %s252, %s268
      %p270 = scmp.eq.s32.totalorder %s29, 0
      %p271 = por %p269, %p270
      %s272 = ssub.s32 %s31, %s38
      %p273 = scmp.eq.s32.totalorder %s272, 0
      %s275 = sadd.s32 %s274, 1
      %s276 = scalar_select %p273, %s274, %s275
      %p279 = pneg %p273
      %p280 = scmp.eq.s32.totalorder %s23, 1
      %p281 = por %p279, %p280
      %p282 = scmp.ne.s32.totalorder %s274, %s277
      %p283 = scmp.eq.s32.totalorder %s23, 0
      %p284 = por %p282, %p283
      %p285 = scmp.ne.s32.totalorder %s274, %s277
      %p286 = scmp.eq.s32.totalorder %s28, 1
      %p287 = por %p285, %p286
      %p288 = scmp.ne.s32.totalorder %s277, %s278
      %p289 = scmp.eq.s32.totalorder %s28, 0
      %p290 = por %p288, %p289
      %p291 = scmp.ne.s32.totalorder %s277, %s278
      %p292 = scmp.eq.s32.totalorder %s29, 1
      %p293 = por %p291, %p292
      %p295 = scmp.ne.s32.totalorder %s278, %s294
      %p296 = scmp.eq.s32.totalorder %s29, 0
      %p297 = por %p295, %p296
      %s298 = ssub.s32 %s31, %s38
      %p299 = scmp.eq.s32.totalorder %s298, 0
      %s301 = sadd.s32 %s300, 1
      %s302 = scalar_select %p299, %s300, %s301
      %p305 = pneg %p299
      %p306 = scmp.eq.s32.totalorder %s23, 1
      %p307 = por %p305, %p306
      %p308 = scmp.ne.s32.totalorder %s300, %s303
      %p309 = scmp.eq.s32.totalorder %s23, 0
      %p310 = por %p308, %p309
      %p311 = scmp.ne.s32.totalorder %s300, %s303
      %p312 = scmp.eq.s32.totalorder %s28, 1
      %p313 = por %p311, %p312
      %p314 = scmp.ne.s32.totalorder %s303, %s304
      %p315 = scmp.eq.s32.totalorder %s28, 0
      %p316 = por %p314, %p315
      %p317 = scmp.ne.s32.totalorder %s303, %s304
      %p318 = scmp.eq.s32.totalorder %s29, 1
      %p319 = por %p317, %p318
      %p321 = scmp.ne.s32.totalorder %s304, %s320
      %p322 = scmp.eq.s32.totalorder %s29, 0
      %p323 = por %p321, %p322
      %s324 = ssub.s32 %s31, %s38
      %p325 = scmp.eq.s32.totalorder %s324, 0
      %s327 = sadd.s32 %s326, 1
      %s328 = scalar_select %p325, %s326, %s327
      %p331 = pneg %p325
      %p332 = scmp.eq.s32.totalorder %s23, 1
      %p333 = por %p331, %p332
      %p334 = scmp.ne.s32.totalorder %s326, %s329
      %p335 = scmp.eq.s32.totalorder %s23, 0
      %p336 = por %p334, %p335
      %p337 = scmp.ne.s32.totalorder %s326, %s329
      %p338 = scmp.eq.s32.totalorder %s28, 1
      %p339 = por %p337, %p338
      %p340 = scmp.ne.s32.totalorder %s329, %s330
      %p341 = scmp.eq.s32.totalorder %s28, 0
      %p342 = por %p340, %p341
      %p343 = scmp.ne.s32.totalorder %s329, %s330
      %p344 = scmp.eq.s32.totalorder %s29, 1
      %p345 = por %p343, %p344
      %p347 = scmp.ne.s32.totalorder %s330, %s346
      %p348 = scmp.eq.s32.totalorder %s29, 0
      %p349 = por %p347, %p348
      %s350 = ssub.s32 %s31, %s38
      %p351 = scmp.eq.s32.totalorder %s350, 0
      %s353 = sadd.s32 %s352, 1
      %s354 = scalar_select %p351, %s352, %s353
      %p357 = pneg %p351
      %p358 = scmp.eq.s32.totalorder %s23, 1
      %p359 = por %p357, %p358
      %p360 = scmp.ne.s32.totalorder %s352, %s355
      %p361 = scmp.eq.s32.totalorder %s23, 0
      %p362 = por %p360, %p361
      %p363 = scmp.ne.s32.totalorder %s352, %s355
      %p364 = scmp.eq.s32.totalorder %s28, 1
      %p365 = por %p363, %p364
      %p366 = scmp.ne.s32.totalorder %s355, %s356
      %p367 = scmp.eq.s32.totalorder %s28, 0
      %p368 = por %p366, %p367
      %p369 = scmp.ne.s32.totalorder %s355, %s356
      %p370 = scmp.eq.s32.totalorder %s29, 1
      %p371 = por %p369, %p370
      %p373 = scmp.ne.s32.totalorder %s356, %s372
      %p374 = scmp.eq.s32.totalorder %s29, 0
      %p375 = por %p373, %p374
      %s376 = ssub.s32 %s31, %s38
      %p377 = scmp.eq.s32.totalorder %s376, 0
      %s379 = sadd.s32 %s378, 1
      %s380 = scalar_select %p377, %s378, %s379
      %p383 = pneg %p377
      %p384 = scmp.eq.s32.totalorder %s23, 1
      %p385 = por %p383, %p384
      %p386 = scmp.ne.s32.totalorder %s378, %s381
      %p387 = scmp.eq.s32.totalorder %s23, 0
      %p388 = por %p386, %p387
      %p389 = scmp.ne.s32.totalorder %s378, %s381
      %p390 = scmp.eq.s32.totalorder %s28, 1
      %p391 = por %p389, %p390
      %p392 = scmp.ne.s32.totalorder %s381, %s382
      %p393 = scmp.eq.s32.totalorder %s28, 0
      %p394 = por %p392, %p393
      %p395 = scmp.ne.s32.totalorder %s381, %s382
      %p396 = scmp.eq.s32.totalorder %s29, 1
      %p397 = por %p395, %p396
      %p399 = scmp.ne.s32.totalorder %s382, %s398
      %p400 = scmp.eq.s32.totalorder %s29, 0
      %p401 = por %p399, %p400
      %s402 = ssub.s32 %s30, %s42
      %p403 = scmp.eq.s32.totalorder %s402, 0
      %s405 = sadd.s32 %s404, 1
      %s406 = scalar_select %p403, %s404, %s405
      %p409 = pneg %p403
      %p410 = scmp.eq.s32.totalorder %s23, 1
      %p411 = por %p409, %p410
      %p412 = scmp.ne.s32.totalorder %s404, %s407
      %p413 = scmp.eq.s32.totalorder %s23, 0
      %p414 = por %p412, %p413
      %p415 = scmp.ne.s32.totalorder %s404, %s407
      %p416 = scmp.eq.s32.totalorder %s28, 1
      %p417 = por %p415, %p416
      %p418 = scmp.ne.s32.totalorder %s407, %s408
      %p419 = scmp.eq.s32.totalorder %s28, 0
      %p420 = por %p418, %p419
      %p421 = scmp.ne.s32.totalorder %s407, %s408
      %p422 = scmp.eq.s32.totalorder %s29, 1
      %p423 = por %p421, %p422
      %p425 = scmp.ne.s32.totalorder %s408, %s424
      %p426 = scmp.eq.s32.totalorder %s29, 0
      %p427 = por %p425, %p426
      %p428 = scmp.le.s32.totalorder 1, %s23
      %p429 = scmp.lt.s32.totalorder %s23, 3
      %p430 = pnand %p428, %p429
      %p431 = pneg %p430
      // Predicated region
      $region9: #{tpu_custom_call.1} parent=5 // pred_check
        _
      $region10: #{tpu_custom_call.1} parent=5 // pred_check_branch
        %433 = sbr.rel (%p430) target = $region12
      $region11: #{tpu_custom_call.1} parent=5 // pred_region
        %s434 = ssub.s32 %s23, 1
        // Predicated region
        $region13: #{tpu_custom_call.1} parent=11 // pred_check
          %p435 = pneg %p61
        $region14: #{tpu_custom_call.1} parent=11 // pred_check_branch
          %437 = sbr.rel (%p435) target = $region16
        $region15: #{tpu_custom_call.1} parent=11 // pred_region
          %s438 = smul.u32 2, %s32
          %s440 = ssub.s32 256, 256
          %441 = vsyncadd [#allocation3], %s440
          %s442 = smul.addr %s438, 128
          %s443 = scalar_lea.hbm %s0, %s442
          %s444 = sshll.u32 [#allocation2], 4
          %s445 = int_to_ptr.vmem [resolvable:$true] %s444
          %450 = dma.hbm_to_vmem [thread:$0]  %s443, 256, %s445, [#allocation3], 128, 128, 8
        $region16: #{tpu_custom_call.1} parent=11 // pred_fallthru
          _
        // Predicated region
        $region17: #{tpu_custom_call.1} parent=11 // pred_check
          %p451 = pneg %p82
        $region18: #{tpu_custom_call.1} parent=11 // pred_check_branch
          %453 = sbr.rel (%p451) target = $region20
        $region19: #{tpu_custom_call.1} parent=11 // pred_region
          %s455 = ssub.s32 256, 256
          %456 = vsyncadd [#allocation6], %s455
          %s457 = sshll.u32 [#allocation5], 4
          %s458 = int_to_ptr.vmem [resolvable:$true] %s457
          %463 = dma.hbm_to_vmem [thread:$0]  %s1, 256, %s458, [#allocation6], 128, 128, 8
        $region20: #{tpu_custom_call.1} parent=11 // pred_fallthru
          _
      $region12: #{tpu_custom_call.1} parent=5 // pred_fallthru
        _
      %p464 = scmp.lt.s32.totalorder %s23, 2
      // Predicated region
      $region21: #{tpu_custom_call.1} parent=5 // pred_check
        %p465 = pneg %p464
      $region22: #{tpu_custom_call.1} parent=5 // pred_check_branch
        %467 = sbr.rel (%p465) target = $region24
      $region23: #{tpu_custom_call.1} parent=5 // pred_region
        // Predicated region
        $region25: #{tpu_custom_call.1} parent=23 // pred_check
          %p468 = pneg %p102
        $region26: #{tpu_custom_call.1} parent=23 // pred_check_branch
          %470 = sbr.rel (%p468) target = $region28
        $region27: #{tpu_custom_call.1} parent=23 // pred_region
          %p471 = scmp.lt.s32.totalorder %s31, 1
          %s472 = scalar_select %p471, %s31, 1
          %s473 = scalar_lea.vmem %s2, %s472
        $region28: #{tpu_custom_call.1} parent=23 // pred_fallthru
          _
        // Predicated region
        $region29: #{tpu_custom_call.1} parent=23 // pred_check
          %p474 = pneg %p128
        $region30: #{tpu_custom_call.1} parent=23 // pred_check_branch
          %476 = sbr.rel (%p474) target = $region32
        $region31: #{tpu_custom_call.1} parent=23 // pred_region
          %p477 = scmp.lt.s32.totalorder %s31, 1
          %s478 = scalar_select %p477, %s31, 1
          %s479 = scalar_lea.vmem %s3, %s478
        $region32: #{tpu_custom_call.1} parent=23 // pred_fallthru
          _
        // Predicated region
        $region33: #{tpu_custom_call.1} parent=23 // pred_check
          %p480 = pneg %p154
        $region34: #{tpu_custom_call.1} parent=23 // pred_check_branch
          %482 = sbr.rel (%p480) target = $region36
        $region35: #{tpu_custom_call.1} parent=23 // pred_region
          %p483 = scmp.lt.s32.totalorder %s31, 1
          %s484 = scalar_select %p483, %s31, 1
          %s485 = smul.addr %s484, 4
          %s486 = smul.addr %s485, 4
          %s487 = scalar_lea.vmem %s4, %s486
        $region36: #{tpu_custom_call.1} parent=23 // pred_fallthru
          _
        // Predicated region
        $region37: #{tpu_custom_call.1} parent=23 // pred_check
          %p488 = pneg %p180
        $region38: #{tpu_custom_call.1} parent=23 // pred_check_branch
          %490 = sbr.rel (%p488) target = $region40
        $region39: #{tpu_custom_call.1} parent=23 // pred_region
          %p491 = scmp.lt.s32.totalorder %s31, 1
          %s492 = scalar_select %p491, %s31, 1
          %s493 = scalar_lea.vmem %s5, %s492
        $region40: #{tpu_custom_call.1} parent=23 // pred_fallthru
          _
        // Predicated region
        $region41: #{tpu_custom_call.1} parent=23 // pred_check
          %p494 = pneg %p206
        $region42: #{tpu_custom_call.1} parent=23 // pred_check_branch
          %496 = sbr.rel (%p494) target = $region44
        $region43: #{tpu_custom_call.1} parent=23 // pred_region
          %p497 = scmp.lt.s32.totalorder %s31, 1
          %s498 = scalar_select %p497, %s31, 1
          %s499 = smul.addr %s498, 4
          %s500 = smul.addr %s499, 4
          %s501 = scalar_lea.vmem %s6, %s500
        $region44: #{tpu_custom_call.1} parent=23 // pred_fallthru
          _
        // Predicated region
        $region45: #{tpu_custom_call.1} parent=23 // pred_check
          %p502 = pneg %p232
        $region46: #{tpu_custom_call.1} parent=23 // pred_check_branch
          %504 = sbr.rel (%p502) target = $region48
        $region47: #{tpu_custom_call.1} parent=23 // pred_region
          %p505 = scmp.lt.s32.totalorder %s31, 1
          %s506 = scalar_select %p505, %s31, 1
          %s507 = scalar_lea.vmem %s7, %s506
        $region48: #{tpu_custom_call.1} parent=23 // pred_fallthru
          _
        // Predicated region
        $region49: #{tpu_custom_call.1} parent=23 // pred_check
          %p508 = pneg %p258
        $region50: #{tpu_custom_call.1} parent=23 // pred_check_branch
          %510 = sbr.rel (%p508) target = $region52
        $region51: #{tpu_custom_call.1} parent=23 // pred_region
          %p511 = scmp.lt.s32.totalorder %s31, 1
          %s512 = scalar_select %p511, %s31, 1
          %s513 = scalar_lea.vmem %s8, %s512
        $region52: #{tpu_custom_call.1} parent=23 // pred_fallthru
          _
        // Predicated region
        $region53: #{tpu_custom_call.1} parent=23 // pred_check
          %p514 = pneg %p284
        $region54: #{tpu_custom_call.1} parent=23 // pred_check_branch
          %516 = sbr.rel (%p514) target = $region56
        $region55: #{tpu_custom_call.1} parent=23 // pred_region
          %p517 = scmp.lt.s32.totalorder %s31, 1
          %s518 = scalar_select %p517, %s31, 1
          %s519 = scalar_lea.vmem %s9, %s518
        $region56: #{tpu_custom_call.1} parent=23 // pred_fallthru
          _
        // Predicated region
        $region57: #{tpu_custom_call.1} parent=23 // pred_check
          %p520 = pneg %p310
        $region58: #{tpu_custom_call.1} parent=23 // pred_check_branch
          %522 = sbr.rel (%p520) target = $region60
        $region59: #{tpu_custom_call.1} parent=23 // pred_region
          %p523 = scmp.lt.s32.totalorder %s31, 1
          %s524 = scalar_select %p523, %s31, 1
          %s525 = smul.addr %s524, 4
          %s526 = smul.addr %s525, 4
          %s527 = scalar_lea.vmem %s10, %s526
        $region60: #{tpu_custom_call.1} parent=23 // pred_fallthru
          _
        // Predicated region
        $region61: #{tpu_custom_call.1} parent=23 // pred_check
          %p528 = pneg %p336
        $region62: #{tpu_custom_call.1} parent=23 // pred_check_branch
          %530 = sbr.rel (%p528) target = $region64
        $region63: #{tpu_custom_call.1} parent=23 // pred_region
          %p531 = scmp.lt.s32.totalorder %s31, 1
          %s532 = scalar_select %p531, %s31, 1
          %s533 = scalar_lea.vmem %s11, %s532
        $region64: #{tpu_custom_call.1} parent=23 // pred_fallthru
          _
        // Predicated region
        $region65: #{tpu_custom_call.1} parent=23 // pred_check
          %p534 = pneg %p362
        $region66: #{tpu_custom_call.1} parent=23 // pred_check_branch
          %536 = sbr.rel (%p534) target = $region68
        $region67: #{tpu_custom_call.1} parent=23 // pred_region
          %p537 = scmp.lt.s32.totalorder %s31, 1
          %s538 = scalar_select %p537, %s31, 1
          %s539 = smul.addr %s538, 8
          %s540 = smul.addr %s539, 4
          %s541 = scalar_lea.vmem %s12, %s540
        $region68: #{tpu_custom_call.1} parent=23 // pred_fallthru
          _
        // Predicated region
        $region69: #{tpu_custom_call.1} parent=23 // pred_check
          %p542 = pneg %p388
        $region70: #{tpu_custom_call.1} parent=23 // pred_check_branch
          %544 = sbr.rel (%p542) target = $region72
        $region71: #{tpu_custom_call.1} parent=23 // pred_region
          %p545 = scmp.lt.s32.totalorder %s31, 1
          %s546 = scalar_select %p545, %s31, 1
          %s547 = scalar_lea.vmem %s13, %s546
        $region72: #{tpu_custom_call.1} parent=23 // pred_fallthru
          _
      $region24: #{tpu_custom_call.1} parent=5 // pred_fallthru
        _
      %p548 = scmp.le.s32.totalorder 1, %s23
      %p549 = scmp.lt.s32.totalorder %s23, 3
      %p550 = pnand %p548, %p549
      %p551 = pneg %p550
      // Predicated region
      $region73: #{tpu_custom_call.1} parent=5 // pred_check
        _
      $region74: #{tpu_custom_call.1} parent=5 // pred_check_branch
        %553 = sbr.rel (%p550) target = $region76
      $region75: #{tpu_custom_call.1} parent=5 // pred_region
        %s554 = ssub.s32 %s23, 1
        // Predicated region
        $region77: #{tpu_custom_call.1} parent=75 // pred_check
          %p555 = pneg %p61
        $region78: #{tpu_custom_call.1} parent=75 // pred_check_branch
          %557 = sbr.rel (%p555) target = $region80
        $region79: #{tpu_custom_call.1} parent=75 // pred_region
          %558 = dma.done [#allocation3], 256
        $region80: #{tpu_custom_call.1} parent=75 // pred_fallthru
          _
        // Predicated region
        $region81: #{tpu_custom_call.1} parent=75 // pred_check
          %p559 = pneg %p82
        $region82: #{tpu_custom_call.1} parent=75 // pred_check_branch
          %561 = sbr.rel (%p559) target = $region84
        $region83: #{tpu_custom_call.1} parent=75 // pred_region
          %562 = dma.done [#allocation6], 256
        $region84: #{tpu_custom_call.1} parent=75 // pred_fallthru
          _
        %p563 = pneg %p61
        %p564 = pneg %p58
        %p565 = pneg %p82
        %p566 = pneg %p79
        %p567 = scmp.lt.s32.totalorder %s33, 1
        %s568 = scalar_select %p567, %s33, 1
        %s569 = scalar_lea.vmem %s2, %s568
        %p570 = pneg %p108
        %p571 = pneg %p105
        %p572 = scmp.lt.s32.totalorder %s33, 1
        %s573 = scalar_select %p572, %s33, 1
        %s574 = scalar_lea.vmem %s3, %s573
        %p575 = pneg %p134
        %p576 = pneg %p131
        %p577 = scmp.lt.s32.totalorder %s33, 1
        %s578 = scalar_select %p577, %s33, 1
        %s579 = smul.addr %s578, 4
        %s580 = smul.addr %s579, 4
        %s581 = scalar_lea.vmem %s4, %s580
        %p582 = pneg %p160
        %p583 = pneg %p157
        %p584 = scmp.lt.s32.totalorder %s33, 1
        %s585 = scalar_select %p584, %s33, 1
        %s586 = scalar_lea.vmem %s5, %s585
        %p587 = pneg %p186
        %p588 = pneg %p183
        %p589 = scmp.lt.s32.totalorder %s33, 1
        %s590 = scalar_select %p589, %s33, 1
        %s591 = smul.addr %s590, 4
        %s592 = smul.addr %s591, 4
        %s593 = scalar_lea.vmem %s6, %s592
        %p594 = pneg %p212
        %p595 = pneg %p209
        %p596 = scmp.lt.s32.totalorder %s33, 1
        %s597 = scalar_select %p596, %s33, 1
        %s598 = scalar_lea.vmem %s7, %s597
        %p599 = pneg %p238
        %p600 = pneg %p235
        %p601 = scmp.lt.s32.totalorder %s33, 1
        %s602 = scalar_select %p601, %s33, 1
        %s603 = scalar_lea.vmem %s8, %s602
        %p604 = pneg %p264
        %p605 = pneg %p261
        %p606 = scmp.lt.s32.totalorder %s33, 1
        %s607 = scalar_select %p606, %s33, 1
        %s608 = scalar_lea.vmem %s9, %s607
        %p609 = pneg %p290
        %p610 = pneg %p287
        %p611 = scmp.lt.s32.totalorder %s33, 1
        %s612 = scalar_select %p611, %s33, 1
        %s613 = smul.addr %s612, 4
        %s614 = smul.addr %s613, 4
        %s615 = scalar_lea.vmem %s10, %s614
        %p616 = pneg %p316
        %p617 = pneg %p313
        %p618 = scmp.lt.s32.totalorder %s33, 1
        %s619 = scalar_select %p618, %s33, 1
        %s620 = scalar_lea.vmem %s11, %s619
        %p621 = pneg %p342
        %p622 = pneg %p339
        %p623 = scmp.lt.s32.totalorder %s33, 1
        %s624 = scalar_select %p623, %s33, 1
        %s625 = smul.addr %s624, 8
        %s626 = smul.addr %s625, 4
        %s627 = scalar_lea.vmem %s12, %s626
        %p628 = pneg %p368
        %p629 = pneg %p365
        %p630 = scmp.lt.s32.totalorder %s33, 1
        %s631 = scalar_select %p630, %s33, 1
        %s632 = scalar_lea.vmem %s13, %s631
        %p633 = pneg %p394
        %p634 = pneg %p391
        %p635 = pneg %p420
        %p636 = pneg %p417
        %s637 = smul.u32 2, %s32
        %p638 = scmp.lt.s32.totalorder %s33, 1
        %s639 = scalar_select %p638, %s33, 1
        %s640 = scalar_lea.vmem %s2, %s639
        %p641 = scmp.lt.s32.totalorder %s33, 1
        %s642 = scalar_select %p641, %s33, 1
        %s643 = scalar_lea.vmem %s3, %s642
        %p644 = scmp.lt.s32.totalorder %s33, 1
        %s645 = scalar_select %p644, %s33, 1
        %s646 = smul.addr %s645, 4
        %s647 = smul.addr %s646, 4
        %s648 = scalar_lea.vmem %s4, %s647
        %p649 = scmp.lt.s32.totalorder %s33, 1
        %s650 = scalar_select %p649, %s33, 1
        %s651 = scalar_lea.vmem %s5, %s650
        %p652 = scmp.lt.s32.totalorder %s33, 1
        %s653 = scalar_select %p652, %s33, 1
        %s654 = smul.addr %s653, 4
        %s655 = smul.addr %s654, 4
        %s656 = scalar_lea.vmem %s6, %s655
        %p657 = scmp.lt.s32.totalorder %s33, 1
        %s658 = scalar_select %p657, %s33, 1
        %s659 = scalar_lea.vmem %s7, %s658
        %p660 = scmp.lt.s32.totalorder %s33, 1
        %s661 = scalar_select %p660, %s33, 1
        %s662 = scalar_lea.vmem %s8, %s661
        %p663 = scmp.lt.s32.totalorder %s33, 1
        %s664 = scalar_select %p663, %s33, 1
        %s665 = scalar_lea.vmem %s9, %s664
        %p666 = scmp.lt.s32.totalorder %s33, 1
        %s667 = scalar_select %p666, %s33, 1
        %s668 = smul.addr %s667, 4
        %s669 = smul.addr %s668, 4
        %s670 = scalar_lea.vmem %s10, %s669
        %p671 = scmp.lt.s32.totalorder %s33, 1
        %s672 = scalar_select %p671, %s33, 1
        %s673 = scalar_lea.vmem %s11, %s672
        %p674 = scmp.lt.s32.totalorder %s33, 1
        %s675 = scalar_select %p674, %s33, 1
        %s676 = smul.addr %s675, 8
        %s677 = smul.addr %s676, 4
        %s678 = scalar_lea.vmem %s12, %s677
        %p679 = scmp.lt.s32.totalorder %s33, 1
        %s680 = scalar_select %p679, %s33, 1
        %s681 = scalar_lea.vmem %s13, %s680
        %s682 = smul.u32 2, %s32
        %p684 = scmp.eq.s32.totalorder %s33, 0
        // Predicated region
        $region85: #{tpu_custom_call.1} parent=75 // pred_check
          %p685 = pneg %p684
        $region86: #{tpu_custom_call.1} parent=75 // pred_check_branch
          %687 = sbr.rel (%p685) target = $region88
        $region87: #{tpu_custom_call.1} parent=75 // pred_region
          %v688 = vld [vmem:[#allocation2] sm:$0xff]
          %v689 = vld [vmem:[#allocation2 + $0x8] sm:$0xff]
          %vm690 = vcmask 261120
          %691 = vst.msk [vmem:[#allocation7] sm:$0xff] %vm690, %v688
          %692 = vst.msk [vmem:[#allocation7 + $0x8] sm:$0xff] %vm690, %v689
        $region88: #{tpu_custom_call.1} parent=75 // pred_fallthru
          _
        %v693 = vld [vmem:[#allocation7] sm:$0xff]
        %v694 = vld [vmem:[#allocation7 + $0x8] sm:$0xff]
        %v695 = vld [vmem:[%s640] sm:$0x1]
        %v696 = vld [vmem:[%s643] sm:$0x1]
        %v697 = vld [vmem:[%s662] sm:$0x1]
        %v698 = vld [vmem:[%s665] sm:$0x1]
        %v699 = vld [vmem:[%s651] sm:$0x1]
        %v700 = vld [vmem:[%s659] sm:$0x1]
        %v701 = vld [vmem:[%s673] sm:$0x1]
        %v702 = vld [vmem:[%s681] sm:$0x1]
        %v703 = vld [vmem:[#allocation5] sm:$0xff]
        %v704 = vld [vmem:[#allocation5 + $0x8] sm:$0xff]
        %vm705 = vcmask 261120
        %v706 = vsel %vm705, %v693, 0.0
        %707 = vadd.xlane.f32.xlu0 %v706
        %v708 = vpop.xlane.xlu0 %707
        %v709 = vsel %vm705, %v694, 0.0
        %710 = vadd.xlane.f32.xlu0 %v709
        %v711 = vpop.xlane.xlu0 %710
        %v712 = vrcp.pop 32.0
        %v713 = vmul.f32 %v708, %v712
        %v714 = vmul.f32 %v711, %v712
        %v715 = vsub.f32 %v693, %v713
        %v716 = vsub.f32 %v694, %v714
        %v717 = vmul.f32 %v715, %v715
        %v718 = vmul.f32 %v716, %v716
        %v719 = vsel %vm705, %v717, 0.0
        %720 = vadd.xlane.f32.xlu0 %v719
        %v721 = vpop.xlane.xlu0 %720
        %v722 = vsel %vm705, %v718, 0.0
        %723 = vadd.xlane.f32.xlu0 %v722
        %v724 = vpop.xlane.xlu0 %723
        %v725 = vmul.f32 %v721, %v712
        %v726 = vmul.f32 %v724, %v712
        %v727 = vadd.f32 %v725, 1e-06
        %v728 = vadd.f32 %v726, 1e-06
        %v729 = vrsqrt.pop %v727
        %v730 = vrsqrt.pop %v728
        %v731 = vmul.f32 %v715, %v729
        %v732 = vmul.f32 %v716, %v730
        %v734 = vlaneseq
        %v735 = vshrl.u32 %v734, 7
        %v736 = vsub.s32 0, %v735
        %v737 = vrot.slane %v695, %v736
        %v739 = vmul.f32 %v731, %v737
        %v740 = vmul.f32 %v732, %v737
        %v742 = vlaneseq
        %v743 = vshrl.u32 %v742, 7
        %v744 = vsub.s32 0, %v743
        %v745 = vrot.slane %v696, %v744
        %v747 = vadd.f32 %v739, %v745
        %v748 = vadd.f32 %v740, %v745
        %v749 = vpack.c.bf16 %v748, %v747
        %v750 = vld [vmem:[%s648] sm:$0xf]
        %v751 = vld [vmem:[%s648 + $0x4] sm:$0xf]
        %v752 = vld [vmem:[%s648 + $0x8] sm:$0xf]
        %v753 = vld [vmem:[%s648 + $0xc] sm:$0xf]
        %v755 = vlaneseq
        %v756 = vshrl.u32 %v755, 7
        %v757 = vsub.s32 0, %v756
        %v758 = vrot.slane %v699, %v757
        %v764 = vunpack.c.l.b16 %v750
        %v765 = vunpack.c.l.b16 %v751
        %v766 = vunpack.c.l.b16 %v752
        %v767 = vunpack.c.l.b16 %v753
        %v768 = vpack.c.b16 %v765, %v764
        %v769 = vpack.c.b16 %v767, %v766
        %v773 = vsel %vm705, %v749, 0
        %775 = vmatprep.subr.bf16.mxu0 0
        %776 = vmatpush1.bf16.msra.mxu0 0
        %777 = vmatprep.subr.bf16.mxu0 0
        %778 = vmatpush1.bf16.msra.mxu0 0
        %779 = vmatprep.subr.bf16.mxu0 0
        %780 = vmatpush1.bf16.msra.mxu0 0
        %781 = vmatprep.subr.bf16.mxu0 0
        %782 = vmatpush1.bf16.msra.mxu0 0
        %783 = vmatprep.subr.bf16.mxu0 0
        %784 = vmatpush1.bf16.msra.mxu0 0
        %785 = vmatprep.subr.bf16.mxu0 0
        %786 = vmatpush1.bf16.msra.mxu0 0
        %787 = vmatprep.subr.bf16.mxu0 0
        %788 = vmatpush1.bf16.msra.mxu0 %v769
        %789 = vmatprep.subr.bf16.mxu0 0
        %790 = vmatpush1.bf16.msra.mxu0 %v768
        %791 = vmatprep.subr.bf16.mxu0 0
        %792 = vmatpush2.bf16.msra.mxu0 0
        %793 = vmatprep.subr.bf16.mxu0 0
        %794 = vmatpush2.bf16.msra.mxu0 0
        %795 = vmatprep.subr.bf16.mxu0 0
        %796 = vmatpush2.bf16.msra.mxu0 0
        %797 = vmatprep.subr.bf16.mxu0 0
        %798 = vmatpush2.bf16.msra.mxu0 0
        %799 = vmatprep.subr.bf16.mxu0 0
        %800 = vmatpush2.bf16.msra.mxu0 0
        %801 = vmatprep.subr.bf16.mxu0 0
        %802 = vmatpush2.bf16.msra.mxu0 0
        %803 = vmatprep.subr.bf16.mxu0 0
        %804 = vmatpush2.bf16.msra.mxu0 0
        %805 = vmatprep.subr.bf16.mxu0 0
        %806 = vmatpush2.bf16.msra.mxu0 0
        %807 = vmatprep.mubr.bf16.mxu0 0
        %808 = vmatmul.mubr.bf16.gmra.mxu0 %v773
        %v809 = vpop.f32.mrf.mxu0
        %v810 = vadd.f32 %v758, %v809
        %v811 = vpop.f32.mrf.mxu0
        %v812 = vpop.f32.mrf.mxu0
        %v813 = vadd.f32 %v758, %v812
        %v814 = vpop.f32.mrf.mxu0
        %815 = vdwg.mxu0
        %v816 = vpack.c.bf16 %v813, %v810
        %818 = vrot.lane.b32.xlu0 %v816, 120
        %v819 = vpop.permute.xlu0 %818
        %820 = vrot.lane.b32.xlu0 %v816, 112
        %v821 = vpop.permute.xlu0 %820
        %822 = vrot.lane.b32.xlu0 %v816, 104
        %v823 = vpop.permute.xlu0 %822
        %824 = vrot.lane.b32.xlu0 %v816, 96
        %v825 = vpop.permute.xlu0 %824
        %vm826 = vcmask 64512
        %v828 = vsel %vm826, %v816, 0
        %v831 = vsel %vm826, %v825, 0
        %833 = vmatprep.subr.bf16.mxu0 0
        %834 = vmatpush1.bf16.xpose.msra.mxu0 0
        %835 = vmatprep.subr.bf16.mxu0 0
        %836 = vmatpush1.bf16.xpose.msra.mxu0 0
        %837 = vmatprep.subr.bf16.mxu0 0
        %838 = vmatpush1.bf16.xpose.msra.mxu0 0
        %839 = vmatprep.subr.bf16.mxu0 0
        %840 = vmatpush1.bf16.xpose.msra.mxu0 0
        %841 = vmatprep.subr.bf16.mxu0 0
        %842 = vmatpush1.bf16.xpose.msra.mxu0 0
        %843 = vmatprep.subr.bf16.mxu0 0
        %844 = vmatpush1.bf16.xpose.msra.mxu0 0
        %845 = vmatprep.subr.bf16.mxu0 0
        %846 = vmatpush1.bf16.xpose.msra.mxu0 0
        %847 = vmatprep.subr.bf16.mxu0 0
        %848 = vmatpush1.bf16.xpose.msra.mxu0 %v831
        %849 = vmatprep.subr.bf16.mxu0 0
        %850 = vmatpush2.bf16.xpose.msra.mxu0 0
        %851 = vmatprep.subr.bf16.mxu0 0
        %852 = vmatpush2.bf16.xpose.msra.mxu0 0
        %853 = vmatprep.subr.bf16.mxu0 0
        %854 = vmatpush2.bf16.xpose.msra.mxu0 0
        %855 = vmatprep.subr.bf16.mxu0 0
        %856 = vmatpush2.bf16.xpose.msra.mxu0 0
        %857 = vmatprep.subr.bf16.mxu0 0
        %858 = vmatpush2.bf16.xpose.msra.mxu0 0
        %859 = vmatprep.subr.bf16.mxu0 0
        %860 = vmatpush2.bf16.xpose.msra.mxu0 0
        %861 = vmatprep.subr.bf16.mxu0 0
        %862 = vmatpush2.bf16.xpose.msra.mxu0 0
        %863 = vmatprep.subr.bf16.mxu0 0
        %864 = vmatpush2.bf16.xpose.msra.mxu0 0
        %865 = vmatprep.mubr.bf16.mxu0 0
        %866 = vmatmul.mubr.bf16.gmra.mxu0 %v828
        %v867 = vpop.f32.mrf.mxu0
        %v868 = vadd.f32 %v703, %v867
        %v869 = vpop.f32.mrf.mxu0
        %v870 = vpop.f32.mrf.mxu0
        %v871 = vadd.f32 %v704, %v870
        %v872 = vpop.f32.mrf.mxu0
        %873 = vdwg.mxu0
        %874 = vrot.lane.b32.xlu0 %v819, 96
        %v875 = vpop.permute.xlu0 %874
        %v877 = vsel %vm826, %v819, 0
        %v880 = vsel %vm826, %v875, 0
        %882 = vmatprep.subr.bf16.mxu0 0
        %883 = vmatpush1.bf16.xpose.msra.mxu0 0
        %884 = vmatprep.subr.bf16.mxu0 0
        %885 = vmatpush1.bf16.xpose.msra.mxu0 0
        %886 = vmatprep.subr.bf16.mxu0 0
        %887 = vmatpush1.bf16.xpose.msra.mxu0 0
        %888 = vmatprep.subr.bf16.mxu0 0
        %889 = vmatpush1.bf16.xpose.msra.mxu0 0
        %890 = vmatprep.subr.bf16.mxu0 0
        %891 = vmatpush1.bf16.xpose.msra.mxu0 0
        %892 = vmatprep.subr.bf16.mxu0 0
        %893 = vmatpush1.bf16.xpose.msra.mxu0 0
        %894 = vmatprep.subr.bf16.mxu0 0
        %895 = vmatpush1.bf16.xpose.msra.mxu0 0
        %896 = vmatprep.subr.bf16.mxu0 0
        %897 = vmatpush1.bf16.xpose.msra.mxu0 %v880
        %898 = vmatprep.subr.bf16.mxu0 0
        %899 = vmatpush2.bf16.xpose.msra.mxu0 0
        %900 = vmatprep.subr.bf16.mxu0 0
        %901 = vmatpush2.bf16.xpose.msra.mxu0 0
        %902 = vmatprep.subr.bf16.mxu0 0
        %903 = vmatpush2.bf16.xpose.msra.mxu0 0
        %904 = vmatprep.subr.bf16.mxu0 0
        %905 = vmatpush2.bf16.xpose.msra.mxu0 0
        %906 = vmatprep.subr.bf16.mxu0 0
        %907 = vmatpush2.bf16.xpose.msra.mxu0 0
        %908 = vmatprep.subr.bf16.mxu0 0
        %909 = vmatpush2.bf16.xpose.msra.mxu0 0
        %910 = vmatprep.subr.bf16.mxu0 0
        %911 = vmatpush2.bf16.xpose.msra.mxu0 0
        %912 = vmatprep.subr.bf16.mxu0 0
        %913 = vmatpush2.bf16.xpose.msra.mxu0 0
        %914 = vmatprep.mubr.bf16.mxu0 0
        %915 = vmatmul.mubr.bf16.gmra.mxu0 %v877
        %v916 = vpop.f32.mrf.mxu0
        %v917 = vadd.f32 %v703, %v916
        %v918 = vpop.f32.mrf.mxu0
        %v919 = vpop.f32.mrf.mxu0
        %v920 = vadd.f32 %v704, %v919
        %v921 = vpop.f32.mrf.mxu0
        %922 = vdwg.mxu0
        %923 = vrot.lane.b32.xlu0 %v821, 96
        %v924 = vpop.permute.xlu0 %923
        %v926 = vsel %vm826, %v821, 0
        %v929 = vsel %vm826, %v924, 0
        %931 = vmatprep.subr.bf16.mxu0 0
        %932 = vmatpush1.bf16.xpose.msra.mxu0 0
        %933 = vmatprep.subr.bf16.mxu0 0
        %934 = vmatpush1.bf16.xpose.msra.mxu0 0
        %935 = vmatprep.subr.bf16.mxu0 0
        %936 = vmatpush1.bf16.xpose.msra.mxu0 0
        %937 = vmatprep.subr.bf16.mxu0 0
        %938 = vmatpush1.bf16.xpose.msra.mxu0 0
        %939 = vmatprep.subr.bf16.mxu0 0
        %940 = vmatpush1.bf16.xpose.msra.mxu0 0
        %941 = vmatprep.subr.bf16.mxu0 0
        %942 = vmatpush1.bf16.xpose.msra.mxu0 0
        %943 = vmatprep.subr.bf16.mxu0 0
        %944 = vmatpush1.bf16.xpose.msra.mxu0 0
        %945 = vmatprep.subr.bf16.mxu0 0
        %946 = vmatpush1.bf16.xpose.msra.mxu0 %v929
        %947 = vmatprep.subr.bf16.mxu0 0
        %948 = vmatpush2.bf16.xpose.msra.mxu0 0
        %949 = vmatprep.subr.bf16.mxu0 0
        %950 = vmatpush2.bf16.xpose.msra.mxu0 0
        %951 = vmatprep.subr.bf16.mxu0 0
        %952 = vmatpush2.bf16.xpose.msra.mxu0 0
        %953 = vmatprep.subr.bf16.mxu0 0
        %954 = vmatpush2.bf16.xpose.msra.mxu0 0
        %955 = vmatprep.subr.bf16.mxu0 0
        %956 = vmatpush2.bf16.xpose.msra.mxu0 0
        %957 = vmatprep.subr.bf16.mxu0 0
        %958 = vmatpush2.bf16.xpose.msra.mxu0 0
        %959 = vmatprep.subr.bf16.mxu0 0
        %960 = vmatpush2.bf16.xpose.msra.mxu0 0
        %961 = vmatprep.subr.bf16.mxu0 0
        %962 = vmatpush2.bf16.xpose.msra.mxu0 0
        %963 = vmatprep.mubr.bf16.mxu0 0
        %964 = vmatmul.mubr.bf16.gmra.mxu0 %v926
        %v965 = vpop.f32.mrf.mxu0
        %v966 = vadd.f32 %v703, %v965
        %v967 = vpop.f32.mrf.mxu0
        %v968 = vpop.f32.mrf.mxu0
        %v969 = vadd.f32 %v704, %v968
        %v970 = vpop.f32.mrf.mxu0
        %971 = vdwg.mxu0
        %972 = vrot.lane.b32.xlu0 %v823, 96
        %v973 = vpop.permute.xlu0 %972
        %v975 = vsel %vm826, %v823, 0
        %v978 = vsel %vm826, %v973, 0
        %980 = vmatprep.subr.bf16.mxu0 0
        %981 = vmatpush1.bf16.xpose.msra.mxu0 0
        %982 = vmatprep.subr.bf16.mxu0 0
        %983 = vmatpush1.bf16.xpose.msra.mxu0 0
        %984 = vmatprep.subr.bf16.mxu0 0
        %985 = vmatpush1.bf16.xpose.msra.mxu0 0
        %986 = vmatprep.subr.bf16.mxu0 0
        %987 = vmatpush1.bf16.xpose.msra.mxu0 0
        %988 = vmatprep.subr.bf16.mxu0 0
        %989 = vmatpush1.bf16.xpose.msra.mxu0 0
        %990 = vmatprep.subr.bf16.mxu0 0
        %991 = vmatpush1.bf16.xpose.msra.mxu0 0
        %992 = vmatprep.subr.bf16.mxu0 0
        %993 = vmatpush1.bf16.xpose.msra.mxu0 0
        %994 = vmatprep.subr.bf16.mxu0 0
        %995 = vmatpush1.bf16.xpose.msra.mxu0 %v978
        %996 = vmatprep.subr.bf16.mxu0 0
        %997 = vmatpush2.bf16.xpose.msra.mxu0 0
        %998 = vmatprep.subr.bf16.mxu0 0
        %999 = vmatpush2.bf16.xpose.msra.mxu0 0
        %1000 = vmatprep.subr.bf16.mxu0 0
        %1001 = vmatpush2.bf16.xpose.msra.mxu0 0
        %1002 = vmatprep.subr.bf16.mxu0 0
        %1003 = vmatpush2.bf16.xpose.msra.mxu0 0
        %1004 = vmatprep.subr.bf16.mxu0 0
        %1005 = vmatpush2.bf16.xpose.msra.mxu0 0
        %1006 = vmatprep.subr.bf16.mxu0 0
        %1007 = vmatpush2.bf16.xpose.msra.mxu0 0
        %1008 = vmatprep.subr.bf16.mxu0 0
        %1009 = vmatpush2.bf16.xpose.msra.mxu0 0
        %1010 = vmatprep.subr.bf16.mxu0 0
        %1011 = vmatpush2.bf16.xpose.msra.mxu0 0
        %1012 = vmatprep.mubr.bf16.mxu0 0
        %1013 = vmatmul.mubr.bf16.gmra.mxu0 %v975
        %v1014 = vpop.f32.mrf.mxu0
        %v1015 = vadd.f32 %v703, %v1014
        %v1016 = vpop.f32.mrf.mxu0
        %v1017 = vpop.f32.mrf.mxu0
        %v1018 = vadd.f32 %v704, %v1017
        %v1019 = vpop.f32.mrf.mxu0
        %1020 = vdwg.mxu0
        %vm1021 = vcmask 130048
        %v1022 = vsel %vm1021, %v868, -inf
        %1023 = vmax.xlane.f32.xlu0 %v1022
        %v1024 = vpop.xlane.xlu0 %1023
        %v1025 = vsel %vm1021, %v871, -inf
        %1026 = vmax.xlane.f32.xlu0 %v1025
        %v1027 = vpop.xlane.xlu0 %1026
        %v1028 = vsel %vm1021, %v917, -inf
        %1029 = vmax.xlane.f32.xlu0 %v1028
        %v1030 = vpop.xlane.xlu0 %1029
        %v1031 = vsel %vm1021, %v920, -inf
        %1032 = vmax.xlane.f32.xlu0 %v1031
        %v1033 = vpop.xlane.xlu0 %1032
        %v1034 = vsel %vm1021, %v966, -inf
        %1035 = vmax.xlane.f32.xlu0 %v1034
        %v1036 = vpop.xlane.xlu0 %1035
        %v1037 = vsel %vm1021, %v969, -inf
        %1038 = vmax.xlane.f32.xlu0 %v1037
        %v1039 = vpop.xlane.xlu0 %1038
        %v1040 = vsel %vm1021, %v1015, -inf
        %1041 = vmax.xlane.f32.xlu0 %v1040
        %v1042 = vpop.xlane.xlu0 %1041
        %v1043 = vsel %vm1021, %v1018, -inf
        %1044 = vmax.xlane.f32.xlu0 %v1043
        %v1045 = vpop.xlane.xlu0 %1044
        %v1046 = vsub.f32 %v868, %v1024
        %v1047 = vsub.f32 %v871, %v1027
        %v1048 = vsub.f32 %v917, %v1030
        %v1049 = vsub.f32 %v920, %v1033
        %v1050 = vsub.f32 %v966, %v1036
        %v1051 = vsub.f32 %v969, %v1039
        %v1052 = vsub.f32 %v1015, %v1042
        %v1053 = vsub.f32 %v1018, %v1045
        %v1054 = vmul.f32 %v1046, 1.442695
        %v1055 = vpow.pop %v1054
        %v1056 = vmul.f32 %v1047, 1.442695
        %v1057 = vpow.pop %v1056
        %v1058 = vmul.f32 %v1048, 1.442695
        %v1059 = vpow.pop %v1058
        %v1060 = vmul.f32 %v1049, 1.442695
        %v1061 = vpow.pop %v1060
        %v1062 = vmul.f32 %v1050, 1.442695
        %v1063 = vpow.pop %v1062
        %v1064 = vmul.f32 %v1051, 1.442695
        %v1065 = vpow.pop %v1064
        %v1066 = vmul.f32 %v1052, 1.442695
        %v1067 = vpow.pop %v1066
        %v1068 = vmul.f32 %v1053, 1.442695
        %v1069 = vpow.pop %v1068
        %v1070 = vsel %vm1021, %v1055, 0.0
        %1071 = vadd.xlane.f32.xlu0 %v1070
        %v1072 = vpop.xlane.xlu0 %1071
        %v1073 = vsel %vm1021, %v1057, 0.0
        %1074 = vadd.xlane.f32.xlu0 %v1073
        %v1075 = vpop.xlane.xlu0 %1074
        %v1076 = vsel %vm1021, %v1059, 0.0
        %1077 = vadd.xlane.f32.xlu0 %v1076
        %v1078 = vpop.xlane.xlu0 %1077
        %v1079 = vsel %vm1021, %v1061, 0.0
        %1080 = vadd.xlane.f32.xlu0 %v1079
        %v1081 = vpop.xlane.xlu0 %1080
        %v1082 = vsel %vm1021, %v1063, 0.0
        %1083 = vadd.xlane.f32.xlu0 %v1082
        %v1084 = vpop.xlane.xlu0 %1083
        %v1085 = vsel %vm1021, %v1065, 0.0
        %1086 = vadd.xlane.f32.xlu0 %v1085
        %v1087 = vpop.xlane.xlu0 %1086
        %v1088 = vsel %vm1021, %v1067, 0.0
        %1089 = vadd.xlane.f32.xlu0 %v1088
        %v1090 = vpop.xlane.xlu0 %1089
        %v1091 = vsel %vm1021, %v1069, 0.0
        %1092 = vadd.xlane.f32.xlu0 %v1091
        %v1093 = vpop.xlane.xlu0 %1092
        %v1094 = vrcp.pop %v1072
        %v1095 = vrcp.pop %v1075
        %v1096 = vrcp.pop %v1078
        %v1097 = vrcp.pop %v1081
        %v1098 = vrcp.pop %v1084
        %v1099 = vrcp.pop %v1087
        %v1100 = vrcp.pop %v1090
        %v1101 = vrcp.pop %v1093
        %v1102 = vmul.f32 %v1055, %v1094
        %v1103 = vmul.f32 %v1057, %v1095
        %v1104 = vmul.f32 %v1059, %v1096
        %v1105 = vmul.f32 %v1061, %v1097
        %v1106 = vmul.f32 %v1063, %v1098
        %v1107 = vmul.f32 %v1065, %v1099
        %v1108 = vmul.f32 %v1067, %v1100
        %v1109 = vmul.f32 %v1069, %v1101
        %v1110 = vpack.c.bf16 %v1103, %v1102
        %v1111 = vpack.c.bf16 %v1105, %v1104
        %v1112 = vpack.c.bf16 %v1107, %v1106
        %v1113 = vpack.c.bf16 %v1109, %v1108
        %1114 = vrot.lane.b32.xlu0 %v816, 64
        %v1115 = vpop.permute.xlu0 %1114
        %v1118 = vsel %vm1021, %v1110, 0
        %1120 = vmatprep.subr.bf16.mxu0 0
        %1121 = vmatpush1.bf16.msra.mxu0 0
        %1122 = vmatprep.subr.bf16.mxu0 0
        %1123 = vmatpush1.bf16.msra.mxu0 0
        %1124 = vmatprep.subr.bf16.mxu0 0
        %1125 = vmatpush1.bf16.msra.mxu0 0
        %1126 = vmatprep.subr.bf16.mxu0 0
        %1127 = vmatpush1.bf16.msra.mxu0 0
        %1128 = vmatprep.subr.bf16.mxu0 0
        %1129 = vmatpush1.bf16.msra.mxu0 0
        %1130 = vmatprep.subr.bf16.mxu0 0
        %1131 = vmatpush1.bf16.msra.mxu0 0
        %1132 = vmatprep.subr.bf16.mxu0 0
        %1133 = vmatpush1.bf16.msra.mxu0 0
        %1134 = vmatprep.subr.bf16.mxu0 0
        %1135 = vmatpush1.bf16.msra.mxu0 %v1115
        %1136 = vmatprep.subr.bf16.mxu0 0
        %1137 = vmatpush2.bf16.msra.mxu0 0
        %1138 = vmatprep.subr.bf16.mxu0 0
        %1139 = vmatpush2.bf16.msra.mxu0 0
        %1140 = vmatprep.subr.bf16.mxu0 0
        %1141 = vmatpush2.bf16.msra.mxu0 0
        %1142 = vmatprep.subr.bf16.mxu0 0
        %1143 = vmatpush2.bf16.msra.mxu0 0
        %1144 = vmatprep.subr.bf16.mxu0 0
        %1145 = vmatpush2.bf16.msra.mxu0 0
        %1146 = vmatprep.subr.bf16.mxu0 0
        %1147 = vmatpush2.bf16.msra.mxu0 0
        %1148 = vmatprep.subr.bf16.mxu0 0
        %1149 = vmatpush2.bf16.msra.mxu0 0
        %1150 = vmatprep.subr.bf16.mxu0 0
        %1151 = vmatpush2.bf16.msra.mxu0 0
        %1152 = vmatprep.mubr.bf16.mxu0 0
        %1153 = vmatmul.mubr.bf16.gmra.mxu0 %v1118
        %v1154 = vpop.f32.mrf.mxu0
        %v1155 = vadd.f32 0.0, %v1154
        %v1156 = vpop.f32.mrf.mxu0
        %v1157 = vpop.f32.mrf.mxu0
        %v1158 = vadd.f32 0.0, %v1157
        %v1159 = vpop.f32.mrf.mxu0
        %1160 = vdwg.mxu0
        %1161 = vrot.lane.b32.xlu0 %v819, 64
        %v1162 = vpop.permute.xlu0 %1161
        %v1165 = vsel %vm1021, %v1111, 0
        %1167 = vmatprep.subr.bf16.mxu0 0
        %1168 = vmatpush1.bf16.msra.mxu0 0
        %1169 = vmatprep.subr.bf16.mxu0 0
        %1170 = vmatpush1.bf16.msra.mxu0 0
        %1171 = vmatprep.subr.bf16.mxu0 0
        %1172 = vmatpush1.bf16.msra.mxu0 0
        %1173 = vmatprep.subr.bf16.mxu0 0
        %1174 = vmatpush1.bf16.msra.mxu0 0
        %1175 = vmatprep.subr.bf16.mxu0 0
        %1176 = vmatpush1.bf16.msra.mxu0 0
        %1177 = vmatprep.subr.bf16.mxu0 0
        %1178 = vmatpush1.bf16.msra.mxu0 0
        %1179 = vmatprep.subr.bf16.mxu0 0
        %1180 = vmatpush1.bf16.msra.mxu0 0
        %1181 = vmatprep.subr.bf16.mxu0 0
        %1182 = vmatpush1.bf16.msra.mxu0 %v1162
        %1183 = vmatprep.subr.bf16.mxu0 0
        %1184 = vmatpush2.bf16.msra.mxu0 0
        %1185 = vmatprep.subr.bf16.mxu0 0
        %1186 = vmatpush2.bf16.msra.mxu0 0
        %1187 = vmatprep.subr.bf16.mxu0 0
        %1188 = vmatpush2.bf16.msra.mxu0 0
        %1189 = vmatprep.subr.bf16.mxu0 0
        %1190 = vmatpush2.bf16.msra.mxu0 0
        %1191 = vmatprep.subr.bf16.mxu0 0
        %1192 = vmatpush2.bf16.msra.mxu0 0
        %1193 = vmatprep.subr.bf16.mxu0 0
        %1194 = vmatpush2.bf16.msra.mxu0 0
        %1195 = vmatprep.subr.bf16.mxu0 0
        %1196 = vmatpush2.bf16.msra.mxu0 0
        %1197 = vmatprep.subr.bf16.mxu0 0
        %1198 = vmatpush2.bf16.msra.mxu0 0
        %1199 = vmatprep.mubr.bf16.mxu0 0
        %1200 = vmatmul.mubr.bf16.gmra.mxu0 %v1165
        %v1201 = vpop.f32.mrf.mxu0
        %v1202 = vadd.f32 0.0, %v1201
        %v1203 = vpop.f32.mrf.mxu0
        %v1204 = vpop.f32.mrf.mxu0
        %v1205 = vadd.f32 0.0, %v1204
        %v1206 = vpop.f32.mrf.mxu0
        %1207 = vdwg.mxu0
        %1208 = vrot.lane.b32.xlu0 %v821, 64
        %v1209 = vpop.permute.xlu0 %1208
        %v1212 = vsel %vm1021, %v1112, 0
        %1214 = vmatprep.subr.bf16.mxu0 0
        %1215 = vmatpush1.bf16.msra.mxu0 0
        %1216 = vmatprep.subr.bf16.mxu0 0
        %1217 = vmatpush1.bf16.msra.mxu0 0
        %1218 = vmatprep.subr.bf16.mxu0 0
        %1219 = vmatpush1.bf16.msra.mxu0 0
        %1220 = vmatprep.subr.bf16.mxu0 0
        %1221 = vmatpush1.bf16.msra.mxu0 0
        %1222 = vmatprep.subr.bf16.mxu0 0
        %1223 = vmatpush1.bf16.msra.mxu0 0
        %1224 = vmatprep.subr.bf16.mxu0 0
        %1225 = vmatpush1.bf16.msra.mxu0 0
        %1226 = vmatprep.subr.bf16.mxu0 0
        %1227 = vmatpush1.bf16.msra.mxu0 0
        %1228 = vmatprep.subr.bf16.mxu0 0
        %1229 = vmatpush1.bf16.msra.mxu0 %v1209
        %1230 = vmatprep.subr.bf16.mxu0 0
        %1231 = vmatpush2.bf16.msra.mxu0 0
        %1232 = vmatprep.subr.bf16.mxu0 0
        %1233 = vmatpush2.bf16.msra.mxu0 0
        %1234 = vmatprep.subr.bf16.mxu0 0
        %1235 = vmatpush2.bf16.msra.mxu0 0
        %1236 = vmatprep.subr.bf16.mxu0 0
        %1237 = vmatpush2.bf16.msra.mxu0 0
        %1238 = vmatprep.subr.bf16.mxu0 0
        %1239 = vmatpush2.bf16.msra.mxu0 0
        %1240 = vmatprep.subr.bf16.mxu0 0
        %1241 = vmatpush2.bf16.msra.mxu0 0
        %1242 = vmatprep.subr.bf16.mxu0 0
        %1243 = vmatpush2.bf16.msra.mxu0 0
        %1244 = vmatprep.subr.bf16.mxu0 0
        %1245 = vmatpush2.bf16.msra.mxu0 0
        %1246 = vmatprep.mubr.bf16.mxu0 0
        %1247 = vmatmul.mubr.bf16.gmra.mxu0 %v1212
        %v1248 = vpop.f32.mrf.mxu0
        %v1249 = vadd.f32 0.0, %v1248
        %v1250 = vpop.f32.mrf.mxu0
        %v1251 = vpop.f32.mrf.mxu0
        %v1252 = vadd.f32 0.0, %v1251
        %v1253 = vpop.f32.mrf.mxu0
        %1254 = vdwg.mxu0
        %1255 = vrot.lane.b32.xlu0 %v823, 64
        %v1256 = vpop.permute.xlu0 %1255
        %v1259 = vsel %vm1021, %v1113, 0
        %1261 = vmatprep.subr.bf16.mxu0 0
        %1262 = vmatpush1.bf16.msra.mxu0 0
        %1263 = vmatprep.subr.bf16.mxu0 0
        %1264 = vmatpush1.bf16.msra.mxu0 0
        %1265 = vmatprep.subr.bf16.mxu0 0
        %1266 = vmatpush1.bf16.msra.mxu0 0
        %1267 = vmatprep.subr.bf16.mxu0 0
        %1268 = vmatpush1.bf16.msra.mxu0 0
        %1269 = vmatprep.subr.bf16.mxu0 0
        %1270 = vmatpush1.bf16.msra.mxu0 0
        %1271 = vmatprep.subr.bf16.mxu0 0
        %1272 = vmatpush1.bf16.msra.mxu0 0
        %1273 = vmatprep.subr.bf16.mxu0 0
        %1274 = vmatpush1.bf16.msra.mxu0 0
        %1275 = vmatprep.subr.bf16.mxu0 0
        %1276 = vmatpush1.bf16.msra.mxu0 %v1256
        %1277 = vmatprep.subr.bf16.mxu0 0
        %1278 = vmatpush2.bf16.msra.mxu0 0
        %1279 = vmatprep.subr.bf16.mxu0 0
        %1280 = vmatpush2.bf16.msra.mxu0 0
        %1281 = vmatprep.subr.bf16.mxu0 0
        %1282 = vmatpush2.bf16.msra.mxu0 0
        %1283 = vmatprep.subr.bf16.mxu0 0
        %1284 = vmatpush2.bf16.msra.mxu0 0
        %1285 = vmatprep.subr.bf16.mxu0 0
        %1286 = vmatpush2.bf16.msra.mxu0 0
        %1287 = vmatprep.subr.bf16.mxu0 0
        %1288 = vmatpush2.bf16.msra.mxu0 0
        %1289 = vmatprep.subr.bf16.mxu0 0
        %1290 = vmatpush2.bf16.msra.mxu0 0
        %1291 = vmatprep.subr.bf16.mxu0 0
        %1292 = vmatpush2.bf16.msra.mxu0 0
        %1293 = vmatprep.mubr.bf16.mxu0 0
        %1294 = vmatmul.mubr.bf16.gmra.mxu0 %v1259
        %v1295 = vpop.f32.mrf.mxu0
        %v1296 = vadd.f32 0.0, %v1295
        %v1297 = vpop.f32.mrf.mxu0
        %v1298 = vpop.f32.mrf.mxu0
        %v1299 = vadd.f32 0.0, %v1298
        %v1300 = vpop.f32.mrf.mxu0
        %1301 = vdwg.mxu0
        %1304 = vrot.lane.b32.xlu0 %v1202, 8
        %v1305 = vpop.permute.xlu0 %1304
        %1306 = vrot.lane.b32.xlu0 %v1205, 8
        %v1307 = vpop.permute.xlu0 %1306
        %1312 = vrot.lane.b32.xlu0 %v1249, 16
        %v1313 = vpop.permute.xlu0 %1312
        %1314 = vrot.lane.b32.xlu0 %v1252, 16
        %v1315 = vpop.permute.xlu0 %1314
        %1320 = vrot.lane.b32.xlu0 %v1296, 24
        %v1321 = vpop.permute.xlu0 %1320
        %1322 = vrot.lane.b32.xlu0 %v1299, 24
        %v1323 = vpop.permute.xlu0 %1322
        %v1326 = vsel %vm826, %v1155, %v1305
        %v1327 = vsel %vm826, %v1158, %v1307
        %v1328 = vsel %vm1021, %v1326, %v1313
        %v1329 = vsel %vm1021, %v1327, %v1315
        %vm1330 = vcmask 195584
        %v1331 = vsel %vm1330, %v1328, %v1321
        %v1332 = vsel %vm1330, %v1329, %v1323
        %v1333 = vpack.c.bf16 %v1332, %v1331
        %v1334 = vld [vmem:[%s656] sm:$0xf]
        %v1335 = vld [vmem:[%s656 + $0x4] sm:$0xf]
        %v1336 = vld [vmem:[%s656 + $0x8] sm:$0xf]
        %v1337 = vld [vmem:[%s656 + $0xc] sm:$0xf]
        %v1339 = vlaneseq
        %v1340 = vshrl.u32 %v1339, 7
        %v1341 = vsub.s32 0, %v1340
        %v1342 = vrot.slane %v700, %v1341
        %v1348 = vunpack.c.l.b16 %v1334
        %v1349 = vunpack.c.l.b16 %v1335
        %v1350 = vunpack.c.l.b16 %v1336
        %v1351 = vunpack.c.l.b16 %v1337
        %v1352 = vpack.c.b16 %v1349, %v1348
        %v1353 = vpack.c.b16 %v1351, %v1350
        %v1357 = vsel %vm705, %v1333, 0
        %1359 = vmatprep.subr.bf16.mxu0 0
        %1360 = vmatpush1.bf16.msra.mxu0 0
        %1361 = vmatprep.subr.bf16.mxu0 0
        %1362 = vmatpush1.bf16.msra.mxu0 0
        %1363 = vmatprep.subr.bf16.mxu0 0
        %1364 = vmatpush1.bf16.msra.mxu0 0
        %1365 = vmatprep.subr.bf16.mxu0 0
        %1366 = vmatpush1.bf16.msra.mxu0 0
        %1367 = vmatprep.subr.bf16.mxu0 0
        %1368 = vmatpush1.bf16.msra.mxu0 0
        %1369 = vmatprep.subr.bf16.mxu0 0
        %1370 = vmatpush1.bf16.msra.mxu0 0
        %1371 = vmatprep.subr.bf16.mxu0 0
        %1372 = vmatpush1.bf16.msra.mxu0 %v1353
        %1373 = vmatprep.subr.bf16.mxu0 0
        %1374 = vmatpush1.bf16.msra.mxu0 %v1352
        %1375 = vmatprep.subr.bf16.mxu0 0
        %1376 = vmatpush2.bf16.msra.mxu0 0
        %1377 = vmatprep.subr.bf16.mxu0 0
        %1378 = vmatpush2.bf16.msra.mxu0 0
        %1379 = vmatprep.subr.bf16.mxu0 0
        %1380 = vmatpush2.bf16.msra.mxu0 0
        %1381 = vmatprep.subr.bf16.mxu0 0
        %1382 = vmatpush2.bf16.msra.mxu0 0
        %1383 = vmatprep.subr.bf16.mxu0 0
        %1384 = vmatpush2.bf16.msra.mxu0 0
        %1385 = vmatprep.subr.bf16.mxu0 0
        %1386 = vmatpush2.bf16.msra.mxu0 0
        %1387 = vmatprep.subr.bf16.mxu0 0
        %1388 = vmatpush2.bf16.msra.mxu0 0
        %1389 = vmatprep.subr.bf16.mxu0 0
        %1390 = vmatpush2.bf16.msra.mxu0 0
        %1391 = vmatprep.mubr.bf16.mxu0 0
        %1392 = vmatmul.mubr.bf16.gmra.mxu0 %v1357
        %v1393 = vpop.f32.mrf.mxu0
        %v1394 = vadd.f32 %v1342, %v1393
        %v1395 = vpop.f32.mrf.mxu0
        %v1396 = vpop.f32.mrf.mxu0
        %v1397 = vadd.f32 %v1342, %v1396
        %v1398 = vpop.f32.mrf.mxu0
        %1399 = vdwg.mxu0
        %v1400 = vadd.f32 %v693, %v1394
        %v1401 = vadd.f32 %v694, %v1397
        %v1402 = vsel %vm705, %v1400, 0.0
        %1403 = vadd.xlane.f32.xlu0 %v1402
        %v1404 = vpop.xlane.xlu0 %1403
        %v1405 = vsel %vm705, %v1401, 0.0
        %1406 = vadd.xlane.f32.xlu0 %v1405
        %v1407 = vpop.xlane.xlu0 %1406
        %v1408 = vmul.f32 %v1404, %v712
        %v1409 = vmul.f32 %v1407, %v712
        %v1410 = vsub.f32 %v1400, %v1408
        %v1411 = vsub.f32 %v1401, %v1409
        %v1412 = vmul.f32 %v1410, %v1410
        %v1413 = vmul.f32 %v1411, %v1411
        %v1414 = vsel %vm705, %v1412, 0.0
        %1415 = vadd.xlane.f32.xlu0 %v1414
        %v1416 = vpop.xlane.xlu0 %1415
        %v1417 = vsel %vm705, %v1413, 0.0
        %1418 = vadd.xlane.f32.xlu0 %v1417
        %v1419 = vpop.xlane.xlu0 %1418
        %v1420 = vmul.f32 %v1416, %v712
        %v1421 = vmul.f32 %v1419, %v712
        %v1422 = vadd.f32 %v1420, 1e-06
        %v1423 = vadd.f32 %v1421, 1e-06
        %v1424 = vrsqrt.pop %v1422
        %v1425 = vrsqrt.pop %v1423
        %v1426 = vmul.f32 %v1410, %v1424
        %v1427 = vmul.f32 %v1411, %v1425
        %v1429 = vlaneseq
        %v1430 = vshrl.u32 %v1429, 7
        %v1431 = vsub.s32 0, %v1430
        %v1432 = vrot.slane %v697, %v1431
        %v1434 = vmul.f32 %v1426, %v1432
        %v1435 = vmul.f32 %v1427, %v1432
        %v1437 = vlaneseq
        %v1438 = vshrl.u32 %v1437, 7
        %v1439 = vsub.s32 0, %v1438
        %v1440 = vrot.slane %v698, %v1439
        %v1442 = vadd.f32 %v1434, %v1440
        %v1443 = vadd.f32 %v1435, %v1440
        %v1444 = vpack.c.bf16 %v1443, %v1442
        %v1445 = vld [vmem:[%s670] sm:$0xf]
        %v1446 = vld [vmem:[%s670 + $0x4] sm:$0xf]
        %v1447 = vld [vmem:[%s670 + $0x8] sm:$0xf]
        %v1448 = vld [vmem:[%s670 + $0xc] sm:$0xf]
        %v1450 = vlaneseq
        %v1451 = vshrl.u32 %v1450, 7
        %v1452 = vsub.s32 0, %v1451
        %v1453 = vrot.slane %v701, %v1452
        %v1459 = vunpack.c.l.b16 %v1445
        %v1460 = vunpack.c.l.b16 %v1446
        %v1461 = vunpack.c.l.b16 %v1447
        %v1462 = vunpack.c.l.b16 %v1448
        %v1463 = vpack.c.b16 %v1460, %v1459
        %v1464 = vpack.c.b16 %v1462, %v1461
        %v1468 = vsel %vm705, %v1444, 0
        %1470 = vmatprep.subr.bf16.mxu0 0
        %1471 = vmatpush1.bf16.msra.mxu0 0
        %1472 = vmatprep.subr.bf16.mxu0 0
        %1473 = vmatpush1.bf16.msra.mxu0 0
        %1474 = vmatprep.subr.bf16.mxu0 0
        %1475 = vmatpush1.bf16.msra.mxu0 0
        %1476 = vmatprep.subr.bf16.mxu0 0
        %1477 = vmatpush1.bf16.msra.mxu0 0
        %1478 = vmatprep.subr.bf16.mxu0 0
        %1479 = vmatpush1.bf16.msra.mxu0 0
        %1480 = vmatprep.subr.bf16.mxu0 0
        %1481 = vmatpush1.bf16.msra.mxu0 0
        %1482 = vmatprep.subr.bf16.mxu0 0
        %1483 = vmatpush1.bf16.msra.mxu0 %v1464
        %1484 = vmatprep.subr.bf16.mxu0 0
        %1485 = vmatpush1.bf16.msra.mxu0 %v1463
        %1486 = vmatprep.subr.bf16.mxu0 0
        %1487 = vmatpush2.bf16.msra.mxu0 0
        %1488 = vmatprep.subr.bf16.mxu0 0
        %1489 = vmatpush2.bf16.msra.mxu0 0
        %1490 = vmatprep.subr.bf16.mxu0 0
        %1491 = vmatpush2.bf16.msra.mxu0 0
        %1492 = vmatprep.subr.bf16.mxu0 0
        %1493 = vmatpush2.bf16.msra.mxu0 0
        %1494 = vmatprep.subr.bf16.mxu0 0
        %1495 = vmatpush2.bf16.msra.mxu0 0
        %1496 = vmatprep.subr.bf16.mxu0 0
        %1497 = vmatpush2.bf16.msra.mxu0 0
        %1498 = vmatprep.subr.bf16.mxu0 0
        %1499 = vmatpush2.bf16.msra.mxu0 0
        %1500 = vmatprep.subr.bf16.mxu0 0
        %1501 = vmatpush2.bf16.msra.mxu0 0
        %1502 = vmatprep.mubr.bf16.mxu0 0
        %1503 = vmatmul.mubr.bf16.gmra.mxu0 %v1468
        %v1504 = vpop.f32.mrf.mxu0
        %v1505 = vadd.f32 %v1453, %v1504
        %v1506 = vpop.f32.mrf.mxu0
        %v1507 = vpop.f32.mrf.mxu0
        %v1508 = vadd.f32 %v1453, %v1507
        %v1509 = vpop.f32.mrf.mxu0
        %1510 = vdwg.mxu0
        %v1511 = vmul.f32 %v1505, 1.702
        %v1512 = vmul.f32 %v1508, 1.702
        %v1513 = vxor.u32 %v1511, 2147483648
        %v1514 = vxor.u32 %v1512, 2147483648
        %v1515 = vmul.f32 %v1513, 1.442695
        %v1516 = vpow.pop %v1515
        %v1517 = vmul.f32 %v1514, 1.442695
        %v1518 = vpow.pop %v1517
        %v1519 = vadd.f32 %v1516, 1.0
        %v1520 = vadd.f32 %v1518, 1.0
        %v1521 = vrcp.pop %v1519
        %v1522 = vmul.f32 1.0, %v1521
        %v1523 = vrcp.pop %v1520
        %v1524 = vmul.f32 1.0, %v1523
        %v1525 = vmul.f32 %v1505, %v1522
        %v1526 = vmul.f32 %v1508, %v1524
        %v1527 = vpack.c.bf16 %v1526, %v1525
        %v1528 = vld [vmem:[%s678] sm:$0xf]
        %v1529 = vld [vmem:[%s678 + $0x4] sm:$0xf]
        %v1530 = vld [vmem:[%s678 + $0x8] sm:$0xf]
        %v1531 = vld [vmem:[%s678 + $0xc] sm:$0xf]
        %v1532 = vld [vmem:[%s678 + $0x10] sm:$0xf]
        %v1533 = vld [vmem:[%s678 + $0x14] sm:$0xf]
        %v1534 = vld [vmem:[%s678 + $0x18] sm:$0xf]
        %v1535 = vld [vmem:[%s678 + $0x1c] sm:$0xf]
        %v1537 = vlaneseq
        %v1538 = vshrl.u32 %v1537, 7
        %v1539 = vsub.s32 0, %v1538
        %v1540 = vrot.slane %v702, %v1539
        %v1550 = vunpack.c.l.b16 %v1528
        %v1551 = vunpack.c.l.b16 %v1529
        %v1552 = vunpack.c.l.b16 %v1530
        %v1553 = vunpack.c.l.b16 %v1531
        %v1554 = vunpack.c.l.b16 %v1532
        %v1555 = vunpack.c.l.b16 %v1533
        %v1556 = vunpack.c.l.b16 %v1534
        %v1557 = vunpack.c.l.b16 %v1535
        %v1558 = vpack.c.b16 %v1551, %v1550
        %v1559 = vpack.c.b16 %v1553, %v1552
        %v1560 = vpack.c.b16 %v1555, %v1554
        %v1561 = vpack.c.b16 %v1557, %v1556
        %vm1566 = vcmask 523264
        %v1568 = vsel %vm1566, %v1527, 0
        %1570 = vmatprep.subr.bf16.mxu0 0
        %1571 = vmatpush1.bf16.msra.mxu0 0
        %1572 = vmatprep.subr.bf16.mxu0 0
        %1573 = vmatpush1.bf16.msra.mxu0 0
        %1574 = vmatprep.subr.bf16.mxu0 0
        %1575 = vmatpush1.bf16.msra.mxu0 0
        %1576 = vmatprep.subr.bf16.mxu0 0
        %1577 = vmatpush1.bf16.msra.mxu0 0
        %1578 = vmatprep.subr.bf16.mxu0 0
        %1579 = vmatpush1.bf16.msra.mxu0 %v1561
        %1580 = vmatprep.subr.bf16.mxu0 0
        %1581 = vmatpush1.bf16.msra.mxu0 %v1560
        %1582 = vmatprep.subr.bf16.mxu0 0
        %1583 = vmatpush1.bf16.msra.mxu0 %v1559
        %1584 = vmatprep.subr.bf16.mxu0 0
        %1585 = vmatpush1.bf16.msra.mxu0 %v1558
        %1586 = vmatprep.subr.bf16.mxu0 0
        %1587 = vmatpush2.bf16.msra.mxu0 0
        %1588 = vmatprep.subr.bf16.mxu0 0
        %1589 = vmatpush2.bf16.msra.mxu0 0
        %1590 = vmatprep.subr.bf16.mxu0 0
        %1591 = vmatpush2.bf16.msra.mxu0 0
        %1592 = vmatprep.subr.bf16.mxu0 0
        %1593 = vmatpush2.bf16.msra.mxu0 0
        %1594 = vmatprep.subr.bf16.mxu0 0
        %1595 = vmatpush2.bf16.msra.mxu0 0
        %1596 = vmatprep.subr.bf16.mxu0 0
        %1597 = vmatpush2.bf16.msra.mxu0 0
        %1598 = vmatprep.subr.bf16.mxu0 0
        %1599 = vmatpush2.bf16.msra.mxu0 0
        %1600 = vmatprep.subr.bf16.mxu0 0
        %1601 = vmatpush2.bf16.msra.mxu0 0
        %1602 = vmatprep.mubr.bf16.mxu0 0
        %1603 = vmatmul.mubr.bf16.gmra.mxu0 %v1568
        %v1604 = vpop.f32.mrf.mxu0
        %v1605 = vadd.f32 %v1540, %v1604
        %v1606 = vpop.f32.mrf.mxu0
        %v1607 = vpop.f32.mrf.mxu0
        %v1608 = vadd.f32 %v1540, %v1607
        %v1609 = vpop.f32.mrf.mxu0
        %1610 = vdwg.mxu0
        %v1611 = vadd.f32 %v1400, %v1605
        %v1612 = vadd.f32 %v1401, %v1608
        %1613 = vst.msk [vmem:[#allocation7] sm:$0xff] %vm705, %v1611
        %1614 = vst.msk [vmem:[#allocation7 + $0x8] sm:$0xff] %vm705, %v1612
        // Predicated region
        $region89: #{tpu_custom_call.1} parent=75 // pred_check
          %p1615 = pneg %p417
        $region90: #{tpu_custom_call.1} parent=75 // pred_check_branch
          %1617 = sbr.rel (%p1615) target = $region92
        $region91: #{tpu_custom_call.1} parent=75 // pred_region
          %s1618 = smul.u32 2, %s32
          %s1620 = ssub.s32 256, 256
          %1621 = vsyncadd [#allocation4], %s1620
          %s1622 = smul.addr %s1618, 128
          %s1623 = scalar_lea.hbm %s14, %s1622
          %s1624 = sshll.u32 [#allocation7], 4
          %s1625 = int_to_ptr.vmem [resolvable:$true] %s1624
          %1630 = dma.vmem_to_hbm [thread:$0]  %s1625, 256, %s1623, [#allocation4], 128, 128, 8
        $region92: #{tpu_custom_call.1} parent=75 // pred_fallthru
          _
        // Predicated region
        $region93: #{tpu_custom_call.1} parent=75 // pred_check
          %p1631 = pneg %p417
        $region94: #{tpu_custom_call.1} parent=75 // pred_check_branch
          %1633 = sbr.rel (%p1631) target = $region96
        $region95: #{tpu_custom_call.1} parent=75 // pred_region
          %1634 = dma.done [#allocation4], 256
        $region96: #{tpu_custom_call.1} parent=75 // pred_fallthru
          _
      $region76: #{tpu_custom_call.1} parent=5 // pred_fallthru
        _
      %p1635 = scmp.le.s32.totalorder 2, %s23
      // Predicated region
      $region97: #{tpu_custom_call.1} parent=5 // pred_check
        %p1636 = pneg %p1635
      $region98: #{tpu_custom_call.1} parent=5 // pred_check_branch
        %1638 = sbr.rel (%p1636) target = $region100
      $region99: #{tpu_custom_call.1} parent=5 // pred_region
        %s1639 = ssub.s32 %s23, 2
      $region100: #{tpu_custom_call.1} parent=5 // pred_fallthru
        _
    $region6: #{tpu_custom_call.1} parent=1 // loop_footer
      %s27 = sadd.s32 1, %s23
    $region7: #{tpu_custom_call.1} parent=1 // loop_footer_branch
      %22 = sbr.rel target = $region3
    $region8: #{tpu_custom_call.1} parent=1 // loop_exit
      _
    %1640 = vsyncpa [#allocation3], 1
    %s1641 = scalar_lea.sflag [#allocation3], 1
    %1642 = vsyncpa %s1641, 1
    %1643 = vsyncpa [#allocation6], 1
    %1644 = vsyncpa [#allocation4], 1
    %s1645 = scalar_lea.sflag [#allocation4], 1
    %1646 = vsyncpa %s1645, 1

</llo_original>
